<compile_context>
chip_gen: v7x
topology: tpu7x:2x2x1
jax: 0.10.0
libtpu: 0.0.40
codegen_flags: <defaults>
</compile_context>

<pallas_src>
import functools

import jax
import jax.numpy as jnp
from jax.experimental import pallas as pl
from jax.experimental.pallas import tpu as pltpu


def _round_up(x, m):
    return (x + m - 1) // m * m


# --------------------------------------------------------------------------------------
# Fused Pallas kernel: full LSTM stack + final fc/sigmoid on the last time step
# --------------------------------------------------------------------------------------
def lstm_stack_kernel(x_ref,        # (T*Bp, Ep)     embedded input, time-major, padded
                      wih0_ref,     # (Ep, 4*Hp)     layer-0 input weights (gate-major)
                      b0_ref,       # (1, 4*Hp)      layer-0 bias (b_ih + b_hh)
                      wih_up_ref,   # (L, Hp, 4*Hp)  layer>=1 input weights (row 0 unused)
                      b_up_ref,     # (L, 1, 4*Hp)   layer>=1 biases        (row 0 unused)
                      whh_ref,      # (L, Hp, 4*Hp)  recurrent weights
                      fcw_ref,      # (Hp, Op)       fc weights
                      fcb_ref,      # (1, Op)        fc bias
                      h0_ref,       # (L, Bp, Hp)
                      c0_ref,       # (L, Bp, Hp)
                      hN_ref,       # (L, Bp, Hp)    out: final hidden state per layer
                      cN_ref,       # (L, Bp, Hp)    out: final cell state per layer
                      sig_ref,      # (Bp, Op)       out: sigmoid(fc(h_T of last layer))
                      gx_sc,        # VMEM (T*Bp, 4*Hp) hoisted input-projection gates
                      hseq_sc,      # VMEM (T*Bp, Hp)   previous layer's output sequence
                      *, T, L, Bp, Hp):

    def run_layer(l, write_seq):
        """Recurrence for layer l; gx_sc already holds its input-projection gates."""
        def step(t, carry):
            h, c = carry
            row = pl.multiple_of(t * Bp, Bp)           # sublane-aligned (Bp is 8*k)
            gates = gx_sc[pl.ds(row, Bp), :] + jnp.dot(
                h, whh_ref[l], preferred_element_type=jnp.float32)   # (Bp, 4*Hp)
            # Gate-major, 128-lane-aligned slices (PyTorch gate order i, f, g, o).
            i = jax.nn.sigmoid(gates[:, 0 * Hp:1 * Hp])
            f = jax.nn.sigmoid(gates[:, 1 * Hp:2 * Hp])
            g = jnp.tanh(gates[:, 2 * Hp:3 * Hp])
            o = jax.nn.sigmoid(gates[:, 3 * Hp:4 * Hp])
            c_new = f * c + i * g
            h_new = o * jnp.tanh(c_new)
            if write_seq:                              # static: last layer skips it
                hseq_sc[pl.ds(row, Bp), :] = h_new
            return h_new, c_new

        h, c = jax.lax.fori_loop(0, T, step, (h0_ref[l], c0_ref[l]))
        hN_ref[l] = h
        cN_ref[l] = c
        return h

    # Layer 0: hoisted input projection (one big MXU matmul, bias folded in).
    gx_sc[...] = (jnp.dot(x_ref[...], wih0_ref[...],
                          preferred_element_type=jnp.float32) + b0_ref[...])
    h_last = run_layer(0, write_seq=(L > 1))

    # Layers 1..L-1: project the previous layer's whole output sequence at once,
    # then run the recurrence.  (No HBM round-trip between layers.)
    for l in range(1, L):
        gx_sc[...] = (jnp.dot(hseq_sc[...], wih_up_ref[l],
                              preferred_element_type=jnp.float32) + b_up_ref[l])
        h_last = run_layer(l, write_seq=(l < L - 1))

    # fc + sigmoid on the final time step only (matches sig.view(B,-1)[:, -1]).
    # TODO(synk): dropout before fc omitted — eval/inference semantics (identity).
    z = jnp.dot(h_last, fcw_ref[...], preferred_element_type=jnp.float32) + fcb_ref[...]
    sig_ref[...] = jax.nn.sigmoid(z)


def _lstm_stack_fc(x_pad, wih0, b0, wih_up, b_up, whh, fcw, fcb, h0, c0,
                   *, T, L, Bp, Hp):
    Op = fcw.shape[1]
    kernel = functools.partial(lstm_stack_kernel, T=T, L=L, Bp=Bp, Hp=Hp)
    vmem = pl.BlockSpec(memory_space=pltpu.MemorySpace.VMEM)
    out_shape = (
        jax.ShapeDtypeStruct((L, Bp, Hp), jnp.float32),   # h_n
        jax.ShapeDtypeStruct((L, Bp, Hp), jnp.float32),   # c_n
        jax.ShapeDtypeStruct((Bp, Op), jnp.float32),      # sigmoid(fc(h_T))
    )
    return pl.pallas_call(
        kernel,
        out_shape=out_shape,
        in_specs=[vmem] * 10,
        out_specs=(vmem, vmem, vmem),
        scratch_shapes=[
            pltpu.VMEM((T * Bp, 4 * Hp), jnp.float32),    # hoisted gate projections
            pltpu.VMEM((T * Bp, Hp), jnp.float32),        # inter-layer h-sequence
        ],
        # Small-shape budget (~a few MiB); fits the 64 MiB v7x / 128 MiB v5e/v6e VMEM.
        compiler_params=pltpu.CompilerParams(vmem_limit_bytes=32 * 1024 * 1024),
    )(x_pad, wih0, b0, wih_up, b_up, whh, fcw, fcb, h0, c0)


# --------------------------------------------------------------------------------------
# Parameter packing (gate-major, lane/sublane padded)
# --------------------------------------------------------------------------------------
def _pack_gates_weight(w, in_dim_pad, H, Hp):
    """w: (4H, in_dim) PyTorch layout (gate order i,f,g,o) -> (in_dim_pad, 4*Hp),
       gate k occupying lane block [k*Hp, k*Hp+H); zeros elsewhere."""
    in_dim = w.shape[1]
    out = jnp.zeros((in_dim_pad, 4 * Hp), jnp.float32)
    for k in range(4):
        out = out.at[:in_dim, k * Hp:k * Hp + H].set(
            jnp.transpose(w[k * H:(k + 1) * H, :]).astype(jnp.float32))
    return out


def _pack_gates_bias(b, H, Hp):
    out = jnp.zeros((1, 4 * Hp), jnp.float32)
    for k in range(4):
        out = out.at[0, k * Hp:k * Hp + H].set(b[k * H:(k + 1) * H].astype(jnp.float32))
    return out


# --------------------------------------------------------------------------------------
# Model wrapper
# --------------------------------------------------------------------------------------
class SentimentRNNPallas:
    def __init__(self, vocab_size, output_size, embedding_dim, hidden_dim, n_layers,
                 drop_prob=0.5, seed=0):
        self.vocab_size = vocab_size
        self.output_size = output_size
        self.embedding_dim = embedding_dim
        self.hidden_dim = hidden_dim
        self.n_layers = n_layers
        self.drop_prob = drop_prob

        key = jax.random.PRNGKey(seed)
        k_emb, k_lstm, k_fc = jax.random.split(key, 3)
        k = 1.0 / jnp.sqrt(hidden_dim)

        # nn.Embedding(vocab_size, embedding_dim): N(0, 1) init.
        self.embedding = jax.random.normal(k_emb, (vocab_size, embedding_dim), jnp.float32)

        # nn.LSTM(embedding_dim, hidden_dim, n_layers, batch_first=True)
        self.lstm_params = []
        lkeys = jax.random.split(k_lstm, n_layers * 4)
        for l in range(n_layers):
            in_dim = embedding_dim if l == 0 else hidden_dim
            w_ih = jax.random.uniform(lkeys[4 * l + 0], (4 * hidden_dim, in_dim),
                                      jnp.float32, -k, k)
            w_hh = jax.random.uniform(lkeys[4 * l + 1], (4 * hidden_dim, hidden_dim),
                                      jnp.float32, -k, k)
            b_ih = jax.random.uniform(lkeys[4 * l + 2], (4 * hidden_dim,),
                                      jnp.float32, -k, k)
            b_hh = jax.random.uniform(lkeys[4 * l + 3], (4 * hidden_dim,),
                                      jnp.float32, -k, k)
            self.lstm_params.append((w_ih, w_hh, b_ih, b_hh))

        # nn.Linear(hidden_dim, output_size)
        kf1, kf2 = jax.random.split(k_fc)
        self.fc_w = jax.random.uniform(kf1, (output_size, hidden_dim), jnp.float32, -k, k)
        self.fc_b = jax.random.uniform(kf2, (output_size,), jnp.float32, -k, k)

        # ---- Pre-pack padded / gate-major kernel parameters once ----
        H = hidden_dim
        self.Hp = _round_up(H, 128)
        self.Ep = _round_up(embedding_dim, 128)
        self.Op = _round_up(output_size, 128)
        Hp = self.Hp

        w_ih0, _, b_ih0, b_hh0 = self.lstm_params[0]
        self.wih0_p = _pack_gates_weight(w_ih0, self.Ep, H, Hp)
        self.b0_p = _pack_gates_bias(b_ih0 + b_hh0, H, Hp)

        wih_up = jnp.zeros((n_layers, Hp, 4 * Hp), jnp.float32)
        b_up = jnp.zeros((n_layers, 1, 4 * Hp), jnp.float32)
        whh = jnp.zeros((n_layers, Hp, 4 * Hp), jnp.float32)
        for l in range(n_layers):
            w_ih, w_hh, b_ih, b_hh = self.lstm_params[l]
            whh = whh.at[l].set(_pack_gates_weight(w_hh, Hp, H, Hp))
            if l > 0:
                wih_up = wih_up.at[l].set(_pack_gates_weight(w_ih, Hp, H, Hp))
                b_up = b_up.at[l].set(_pack_gates_bias(b_ih + b_hh, H, Hp))
        self.wih_up_p, self.b_up_p, self.whh_p = wih_up, b_up, whh

        self.fcw_p = (jnp.zeros((Hp, self.Op), jnp.float32)
                      .at[:H, :output_size].set(jnp.transpose(self.fc_w)))
        self.fcb_p = jnp.zeros((1, self.Op), jnp.float32).at[0, :output_size].set(self.fc_b)

    def init_hidden(self, batch_size):
        z = jnp.zeros((self.n_layers, batch_size, self.hidden_dim), jnp.float32)
        return (z, z)

    def forward(self, x, hidden):
        """x: (B, T) int32; hidden: ((n_layers,B,H), (n_layers,B,H))."""
        B, T = x.shape
        H, E, O, L = self.hidden_dim, self.embedding_dim, self.output_size, self.n_layers
        Hp, Ep, Op = self.Hp, self.Ep, self.Op
        Bp = _round_up(B, 8)

        # Embedding gather + time-major transpose + pad to vreg geometry (glue ops;
        # the hot-path matmuls / recurrence / fc all live inside the fused kernel).
        emb = jnp.take(self.embedding, x, axis=0)            # (B, T, E)
        emb_tm = jnp.transpose(emb, (1, 0, 2))                # (T, B, E)
        x_pad = (jnp.zeros((T, Bp, Ep), jnp.float32)
                 .at[:, :B, :E].set(emb_tm)
                 .reshape(T * Bp, Ep))

        h0, c0 = hidden
        h0_p = jnp.zeros((L, Bp, Hp), jnp.float32).at[:, :B, :H].set(h0)
        c0_p = jnp.zeros((L, Bp, Hp), jnp.float32).at[:, :B, :H].set(c0)

        hN_p, cN_p, sig_p = _lstm_stack_fc(
            x_pad, self.wih0_p, self.b0_p, self.wih_up_p, self.b_up_p, self.whh_p,
            self.fcw_p, self.fcb_p, h0_p, c0_p, T=T, L=L, Bp=Bp, Hp=Hp)

        hN = hN_p[:, :B, :H]
        cN = cN_p[:, :B, :H]
        # Original PyTorch keeps sig.view(B,-1)[:, -1] == last output unit at the last
        # time step; the kernel computed fc only for the last step, so take unit O-1.
        # TODO(synk): inter-layer LSTM dropout & nn.Dropout (p=0.5) omitted — eval semantics.
        sig_last = sig_p[:B, O - 1]
        return sig_last, (hN, cN)


# --------------------------------------------------------------------------------------
# Pure-JAX reference (for correctness check)
# --------------------------------------------------------------------------------------
def reference_forward(model, x, hidden):
    B, T = x.shape
    H = model.hidden_dim
    emb = jnp.take(model.embedding, x, axis=0)
    inp = emb
    h_all, c_all = hidden
    h_fin, c_fin = [], []
    for l in range(model.n_layers):
        w_ih, w_hh, b_ih, b_hh = model.lstm_params[l]
        h, c = h_all[l], c_all[l]
        outs = []
        for t in range(T):
            g = inp[:, t, :] @ w_ih.T + b_ih + h @ w_hh.T + b_hh
            i = jax.nn.sigmoid(g[:, :H])
            f = jax.nn.sigmoid(g[:, H:2 * H])
            gg = jnp.tanh(g[:, 2 * H:3 * H])
            o = jax.nn.sigmoid(g[:, 3 * H:4 * H])
            c = f * c + i * gg
            h = o * jnp.tanh(c)
            outs.append(h)
        inp = jnp.stack(outs, axis=1)
        h_fin.append(h)
        c_fin.append(c)
    flat = inp.reshape(-1, H)
    sig = jax.nn.sigmoid(flat @ model.fc_w.T + model.fc_b)
    sig = sig.reshape(B, -1)[:, -1]
    return sig, (jnp.stack(h_fin), jnp.stack(c_fin))


# --------------------------------------------------------------------------------------
if __name__ == "__main__":
    vocab_size = 50
    output_size = 1
    embedding_dim = 32
    hidden_dim = 32
    n_layers = 2
    batch_size = 2
    seq_len = 8

    model = SentimentRNNPallas(vocab_size, output_size, embedding_dim, hidden_dim,
                               n_layers, drop_prob=0.5, seed=0)

    key = jax.random.PRNGKey(0)
    x = jax.random.randint(key, (batch_size, seq_len), 0, vocab_size, dtype=jnp.int32)
    hidden = model.init_hidden(batch_size)

    sig_out, (h_n, c_n) = model.forward(x, hidden)
    jax.block_until_ready((sig_out, h_n, c_n))

    ref_sig, (ref_h, ref_c) = reference_forward(model, x, hidden)
    assert sig_out.shape == (batch_size,)
    assert h_n.shape == (n_layers, batch_size, hidden_dim)
    assert c_n.shape == (n_layers, batch_size, hidden_dim)
    assert jnp.allclose(sig_out, ref_sig, atol=2e-3, rtol=2e-3)
    assert jnp.allclose(h_n, ref_h, atol=2e-3, rtol=2e-3)
    assert jnp.allclose(c_n, ref_c, atol=2e-3, rtol=2e-3)

    print("KERNEL_OK")
</pallas_src>

<mosaic_0001>
module attributes {stable_mosaic.version = 11 : i64} {
  func.func @lstm_stack_kernel(%arg0: memref<64x128xf32, #tpu.memory_space<vmem>>, %arg1: memref<128x512xf32, #tpu.memory_space<vmem>>, %arg2: memref<1x512xf32, #tpu.memory_space<vmem>>, %arg3: memref<2x128x512xf32, #tpu.memory_space<vmem>>, %arg4: memref<2x1x512xf32, #tpu.memory_space<vmem>>, %arg5: memref<2x128x512xf32, #tpu.memory_space<vmem>>, %arg6: memref<128x128xf32, #tpu.memory_space<vmem>>, %arg7: memref<1x128xf32, #tpu.memory_space<vmem>>, %arg8: memref<2x8x128xf32, #tpu.memory_space<vmem>>, %arg9: memref<2x8x128xf32, #tpu.memory_space<vmem>>, %arg10: memref<2x8x128xf32, #tpu.memory_space<vmem>>, %arg11: memref<2x8x128xf32, #tpu.memory_space<vmem>>, %arg12: memref<8x128xf32, #tpu.memory_space<vmem>>, %arg13: memref<64x512xf32, #tpu.memory_space<vmem>>, %arg14: memref<64x128xf32, #tpu.memory_space<vmem>>) attributes {dimension_semantics = [], scalar_prefetch = 0 : i64, scratch_operands = 2 : i64, tpu.core_type = #tpu.core_type<tc>} {
    %c0 = arith.constant 0 : index
    %c0_0 = arith.constant 0 : index
    %0 = vector.load %arg0[%c0, %c0_0] : memref<64x128xf32, #tpu.memory_space<vmem>>, vector<64x128xf32>
    %c0_1 = arith.constant 0 : index
    %c0_2 = arith.constant 0 : index
    %1 = vector.load %arg1[%c0_1, %c0_2] : memref<128x512xf32, #tpu.memory_space<vmem>>, vector<128x512xf32>
    %cst = arith.constant dense<0.000000e+00> : vector<64x512xf32>
    %2 = tpu.matmul %0, %1, %cst {dimension_numbers = #tpu.dot_dimension_numbers<[1], [0], [0], [1], [0, 0, 1, 1], [], []>} : vector<64x128xf32>, vector<128x512xf32>, vector<64x512xf32> -> vector<64x512xf32>
    %c0_3 = arith.constant 0 : index
    %c0_4 = arith.constant 0 : index
    %3 = vector.load %arg2[%c0_3, %c0_4] : memref<1x512xf32, #tpu.memory_space<vmem>>, vector<1x512xf32>
    %4 = vector.broadcast %3 : vector<1x512xf32> to vector<64x512xf32>
    %5 = arith.addf %2, %4 : vector<64x512xf32>
    %c0_5 = arith.constant 0 : index
    %c0_6 = arith.constant 0 : index
    %6 = vector.load %arg13[%c0_5, %c0_6] : memref<64x512xf32, #tpu.memory_space<vmem>>, vector<64x512xf32>
    tpu.vector_store %arg13[%c0_5, %c0_6], %5 {strides = array<i32>} : memref<64x512xf32, #tpu.memory_space<vmem>>, vector<64x512xf32>,
    %c0_7 = arith.constant 0 : index
    %c0_8 = arith.constant 0 : index
    %c0_9 = arith.constant 0 : index
    %7 = vector.load %arg8[%c0_7, %c0_8, %c0_9] : memref<2x8x128xf32, #tpu.memory_space<vmem>>, vector<1x8x128xf32>
    %8 = vector.shape_cast %7 : vector<1x8x128xf32> to vector<8x128xf32>
    %c0_10 = arith.constant 0 : index
    %c0_11 = arith.constant 0 : index
    %c0_12 = arith.constant 0 : index
    %9 = vector.load %arg9[%c0_10, %c0_11, %c0_12] : memref<2x8x128xf32, #tpu.memory_space<vmem>>, vector<1x8x128xf32>
    %10 = vector.shape_cast %9 : vector<1x8x128xf32> to vector<8x128xf32>
    %c0_i32 = arith.constant 0 : i32
    %c8_i32 = arith.constant 8 : i32
    %11 = arith.addi %c0_i32, %c8_i32 : i32
    %c1_i32 = arith.constant 1 : i32
    %12:2 = scf.for %arg15 = %c0_i32 to %11 step %c1_i32 iter_args(%arg16 = %8, %arg17 = %10) -> (vector<8x128xf32>, vector<8x128xf32>)  : i32 {
      %c8_i32_54 = arith.constant 8 : i32
      %51 = arith.muli %arg15, %c8_i32_54 : i32
      %52 = tpu.assume_multiple %51, 8 : i32
      %53 = arith.index_cast %52 : i32 to index
      %c0_55 = arith.constant 0 : index
      %54 = vector.load %arg13[%53, %c0_55] : memref<64x512xf32, #tpu.memory_space<vmem>>, vector<8x512xf32>
      %c0_56 = arith.constant 0 : index
      %c0_57 = arith.constant 0 : index
      %c0_58 = arith.constant 0 : index
      %55 = vector.load %arg5[%c0_56, %c0_57, %c0_58] : memref<2x128x512xf32, #tpu.memory_space<vmem>>, vector<1x128x512xf32>
      %56 = vector.shape_cast %55 : vector<1x128x512xf32> to vector<128x512xf32>
      %cst_59 = arith.constant dense<0.000000e+00> : vector<8x512xf32>
      %57 = tpu.matmul %arg16, %56, %cst_59 {dimension_numbers = #tpu.dot_dimension_numbers<[1], [0], [0], [1], [0, 0, 1, 1], [], []>} : vector<8x128xf32>, vector<128x512xf32>, vector<8x512xf32> -> vector<8x512xf32>
      %58 = arith.addf %54, %57 : vector<8x512xf32>
      %59 = vector.extract_strided_slice %58 {offsets = [0, 0], sizes = [8, 128], strides = [1, 1]} : vector<8x512xf32> to vector<8x128xf32>
      %60 = arith.negf %59 : vector<8x128xf32>
      %61 = math.exp %60 : vector<8x128xf32>
      %cst_60 = arith.constant 1.000000e+00 : f32
      %62 = vector.broadcast %cst_60 : f32 to vector<8x128xf32>
      %63 = arith.addf %62, %61 : vector<8x128xf32>
      %64 = arith.divf %62, %63 : vector<8x128xf32>
      %65 = vector.extract_strided_slice %58 {offsets = [0, 128], sizes = [8, 128], strides = [1, 1]} : vector<8x512xf32> to vector<8x128xf32>
      %66 = arith.negf %65 : vector<8x128xf32>
      %67 = math.exp %66 : vector<8x128xf32>
      %cst_61 = arith.constant 1.000000e+00 : f32
      %68 = vector.broadcast %cst_61 : f32 to vector<8x128xf32>
      %69 = arith.addf %68, %67 : vector<8x128xf32>
      %70 = arith.divf %68, %69 : vector<8x128xf32>
      %71 = vector.extract_strided_slice %58 {offsets = [0, 256], sizes = [8, 128], strides = [1, 1]} : vector<8x512xf32> to vector<8x128xf32>
      %72 = math.tanh %71 : vector<8x128xf32>
      %73 = vector.extract_strided_slice %58 {offsets = [0, 384], sizes = [8, 128], strides = [1, 1]} : vector<8x512xf32> to vector<8x128xf32>
      %74 = arith.negf %73 : vector<8x128xf32>
      %75 = math.exp %74 : vector<8x128xf32>
      %cst_62 = arith.constant 1.000000e+00 : f32
      %76 = vector.broadcast %cst_62 : f32 to vector<8x128xf32>
      %77 = arith.addf %76, %75 : vector<8x128xf32>
      %78 = arith.divf %76, %77 : vector<8x128xf32>
      %79 = arith.mulf %70, %arg17 : vector<8x128xf32>
      %80 = arith.mulf %64, %72 : vector<8x128xf32>
      %81 = arith.addf %79, %80 : vector<8x128xf32>
      %82 = math.tanh %81 : vector<8x128xf32>
      %83 = arith.mulf %78, %82 : vector<8x128xf32>
      %84 = arith.index_cast %52 : i32 to index
      %c0_63 = arith.constant 0 : index
      %85 = vector.load %arg14[%84, %c0_63] : memref<64x128xf32, #tpu.memory_space<vmem>>, vector<8x128xf32>
      tpu.vector_store %arg14[%84, %c0_63], %83 {strides = array<i32>} : memref<64x128xf32, #tpu.memory_space<vmem>>, vector<8x128xf32>,
      scf.yield %83, %81 : vector<8x128xf32>, vector<8x128xf32>
    }
    %c8_i32_13 = arith.constant 8 : i32
    %c0_14 = arith.constant 0 : index
    %c0_15 = arith.constant 0 : index
    %c0_16 = arith.constant 0 : index
    %13 = vector.load %arg10[%c0_14, %c0_15, %c0_16] : memref<2x8x128xf32, #tpu.memory_space<vmem>>, vector<1x8x128xf32>
    %14 = vector.shape_cast %13 : vector<1x8x128xf32> to vector<8x128xf32>
    %15 = vector.shape_cast %12#0 : vector<8x128xf32> to vector<1x8x128xf32>
    tpu.vector_store %arg10[%c0_14, %c0_15, %c0_16], %15 {strides = array<i32>} : memref<2x8x128xf32, #tpu.memory_space<vmem>>, vector<1x8x128xf32>,
    %c0_17 = arith.constant 0 : index
    %c0_18 = arith.constant 0 : index
    %c0_19 = arith.constant 0 : index
    %16 = vector.load %arg11[%c0_17, %c0_18, %c0_19] : memref<2x8x128xf32, #tpu.memory_space<vmem>>, vector<1x8x128xf32>
    %17 = vector.shape_cast %16 : vector<1x8x128xf32> to vector<8x128xf32>
    %18 = vector.shape_cast %12#1 : vector<8x128xf32> to vector<1x8x128xf32>
    tpu.vector_store %arg11[%c0_17, %c0_18, %c0_19], %18 {strides = array<i32>} : memref<2x8x128xf32, #tpu.memory_space<vmem>>, vector<1x8x128xf32>,
    %c0_20 = arith.constant 0 : index
    %c0_21 = arith.constant 0 : index
    %19 = vector.load %arg14[%c0_20, %c0_21] : memref<64x128xf32, #tpu.memory_space<vmem>>, vector<64x128xf32>
    %c1 = arith.constant 1 : index
    %c0_22 = arith.constant 0 : index
    %c0_23 = arith.constant 0 : index
    %20 = vector.load %arg3[%c1, %c0_22, %c0_23] : memref<2x128x512xf32, #tpu.memory_space<vmem>>, vector<1x128x512xf32>
    %21 = vector.shape_cast %20 : vector<1x128x512xf32> to vector<128x512xf32>
    %cst_24 = arith.constant dense<0.000000e+00> : vector<64x512xf32>
    %22 = tpu.matmul %19, %21, %cst_24 {dimension_numbers = #tpu.dot_dimension_numbers<[1], [0], [0], [1], [0, 0, 1, 1], [], []>} : vector<64x128xf32>, vector<128x512xf32>, vector<64x512xf32> -> vector<64x512xf32>
    %c1_25 = arith.constant 1 : index
    %c0_26 = arith.constant 0 : index
    %c0_27 = arith.constant 0 : index
    %23 = vector.load %arg4[%c1_25, %c0_26, %c0_27] : memref<2x1x512xf32, #tpu.memory_space<vmem>>, vector<1x1x512xf32>
    %24 = vector.shape_cast %23 : vector<1x1x512xf32> to vector<1x512xf32>
    %25 = vector.broadcast %24 : vector<1x512xf32> to vector<64x512xf32>
    %26 = arith.addf %22, %25 : vector<64x512xf32>
    %c0_28 = arith.constant 0 : index
    %c0_29 = arith.constant 0 : index
    %27 = vector.load %arg13[%c0_28, %c0_29] : memref<64x512xf32, #tpu.memory_space<vmem>>, vector<64x512xf32>
    tpu.vector_store %arg13[%c0_28, %c0_29], %26 {strides = array<i32>} : memref<64x512xf32, #tpu.memory_space<vmem>>, vector<64x512xf32>,
    %c1_30 = arith.constant 1 : index
    %c0_31 = arith.constant 0 : index
    %c0_32 = arith.constant 0 : index
    %28 = vector.load %arg8[%c1_30, %c0_31, %c0_32] : memref<2x8x128xf32, #tpu.memory_space<vmem>>, vector<1x8x128xf32>
    %29 = vector.shape_cast %28 : vector<1x8x128xf32> to vector<8x128xf32>
    %c1_33 = arith.constant 1 : index
    %c0_34 = arith.constant 0 : index
    %c0_35 = arith.constant 0 : index
    %30 = vector.load %arg9[%c1_33, %c0_34, %c0_35] : memref<2x8x128xf32, #tpu.memory_space<vmem>>, vector<1x8x128xf32>
    %31 = vector.shape_cast %30 : vector<1x8x128xf32> to vector<8x128xf32>
    %c0_i32_36 = arith.constant 0 : i32
    %c8_i32_37 = arith.constant 8 : i32
    %32 = arith.addi %c0_i32_36, %c8_i32_37 : i32
    %c1_i32_38 = arith.constant 1 : i32
    %33:2 = scf.for %arg15 = %c0_i32_36 to %32 step %c1_i32_38 iter_args(%arg16 = %29, %arg17 = %31) -> (vector<8x128xf32>, vector<8x128xf32>)  : i32 {
      %c8_i32_54 = arith.constant 8 : i32
      %51 = arith.muli %arg15, %c8_i32_54 : i32
      %52 = tpu.assume_multiple %51, 8 : i32
      %53 = arith.index_cast %52 : i32 to index
      %c0_55 = arith.constant 0 : index
      %54 = vector.load %arg13[%53, %c0_55] : memref<64x512xf32, #tpu.memory_space<vmem>>, vector<8x512xf32>
      %c1_56 = arith.constant 1 : index
      %c0_57 = arith.constant 0 : index
      %c0_58 = arith.constant 0 : index
      %55 = vector.load %arg5[%c1_56, %c0_57, %c0_58] : memref<2x128x512xf32, #tpu.memory_space<vmem>>, vector<1x128x512xf32>
      %56 = vector.shape_cast %55 : vector<1x128x512xf32> to vector<128x512xf32>
      %cst_59 = arith.constant dense<0.000000e+00> : vector<8x512xf32>
      %57 = tpu.matmul %arg16, %56, %cst_59 {dimension_numbers = #tpu.dot_dimension_numbers<[1], [0], [0], [1], [0, 0, 1, 1], [], []>} : vector<8x128xf32>, vector<128x512xf32>, vector<8x512xf32> -> vector<8x512xf32>
      %58 = arith.addf %54, %57 : vector<8x512xf32>
      %59 = vector.extract_strided_slice %58 {offsets = [0, 0], sizes = [8, 128], strides = [1, 1]} : vector<8x512xf32> to vector<8x128xf32>
      %60 = arith.negf %59 : vector<8x128xf32>
      %61 = math.exp %60 : vector<8x128xf32>
      %cst_60 = arith.constant 1.000000e+00 : f32
      %62 = vector.broadcast %cst_60 : f32 to vector<8x128xf32>
      %63 = arith.addf %62, %61 : vector<8x128xf32>
      %64 = arith.divf %62, %63 : vector<8x128xf32>
      %65 = vector.extract_strided_slice %58 {offsets = [0, 128], sizes = [8, 128], strides = [1, 1]} : vector<8x512xf32> to vector<8x128xf32>
      %66 = arith.negf %65 : vector<8x128xf32>
      %67 = math.exp %66 : vector<8x128xf32>
      %cst_61 = arith.constant 1.000000e+00 : f32
      %68 = vector.broadcast %cst_61 : f32 to vector<8x128xf32>
      %69 = arith.addf %68, %67 : vector<8x128xf32>
      %70 = arith.divf %68, %69 : vector<8x128xf32>
      %71 = vector.extract_strided_slice %58 {offsets = [0, 256], sizes = [8, 128], strides = [1, 1]} : vector<8x512xf32> to vector<8x128xf32>
      %72 = math.tanh %71 : vector<8x128xf32>
      %73 = vector.extract_strided_slice %58 {offsets = [0, 384], sizes = [8, 128], strides = [1, 1]} : vector<8x512xf32> to vector<8x128xf32>
      %74 = arith.negf %73 : vector<8x128xf32>
      %75 = math.exp %74 : vector<8x128xf32>
      %cst_62 = arith.constant 1.000000e+00 : f32
      %76 = vector.broadcast %cst_62 : f32 to vector<8x128xf32>
      %77 = arith.addf %76, %75 : vector<8x128xf32>
      %78 = arith.divf %76, %77 : vector<8x128xf32>
      %79 = arith.mulf %70, %arg17 : vector<8x128xf32>
      %80 = arith.mulf %64, %72 : vector<8x128xf32>
      %81 = arith.addf %79, %80 : vector<8x128xf32>
      %82 = math.tanh %81 : vector<8x128xf32>
      %83 = arith.mulf %78, %82 : vector<8x128xf32>
      scf.yield %83, %81 : vector<8x128xf32>, vector<8x128xf32>
    }
    %c8_i32_39 = arith.constant 8 : i32
    %c1_40 = arith.constant 1 : index
    %c0_41 = arith.constant 0 : index
    %c0_42 = arith.constant 0 : index
    %34 = vector.load %arg10[%c1_40, %c0_41, %c0_42] : memref<2x8x128xf32, #tpu.memory_space<vmem>>, vector<1x8x128xf32>
    %35 = vector.shape_cast %34 : vector<1x8x128xf32> to vector<8x128xf32>
    %36 = vector.shape_cast %33#0 : vector<8x128xf32> to vector<1x8x128xf32>
    tpu.vector_store %arg10[%c1_40, %c0_41, %c0_42], %36 {strides = array<i32>} : memref<2x8x128xf32, #tpu.memory_space<vmem>>, vector<1x8x128xf32>,
    %c1_43 = arith.constant 1 : index
    %c0_44 = arith.constant 0 : index
    %c0_45 = arith.constant 0 : index
    %37 = vector.load %arg11[%c1_43, %c0_44, %c0_45] : memref<2x8x128xf32, #tpu.memory_space<vmem>>, vector<1x8x128xf32>
    %38 = vector.shape_cast %37 : vector<1x8x128xf32> to vector<8x128xf32>
    %39 = vector.shape_cast %33#1 : vector<8x128xf32> to vector<1x8x128xf32>
    tpu.vector_store %arg11[%c1_43, %c0_44, %c0_45], %39 {strides = array<i32>} : memref<2x8x128xf32, #tpu.memory_space<vmem>>, vector<1x8x128xf32>,
    %c0_46 = arith.constant 0 : index
    %c0_47 = arith.constant 0 : index
    %40 = vector.load %arg6[%c0_46, %c0_47] : memref<128x128xf32, #tpu.memory_space<vmem>>, vector<128x128xf32>
    %cst_48 = arith.constant dense<0.000000e+00> : vector<8x128xf32>
    %41 = tpu.matmul %33#0, %40, %cst_48 {dimension_numbers = #tpu.dot_dimension_numbers<[1], [0], [0], [1], [0, 0, 1, 1], [], []>} : vector<8x128xf32>, vector<128x128xf32>, vector<8x128xf32> -> vector<8x128xf32>
    %c0_49 = arith.constant 0 : index
    %c0_50 = arith.constant 0 : index
    %42 = vector.load %arg7[%c0_49, %c0_50] : memref<1x128xf32, #tpu.memory_space<vmem>>, vector<1x128xf32>
    %43 = vector.broadcast %42 : vector<1x128xf32> to vector<8x128xf32>
    %44 = arith.addf %41, %43 : vector<8x128xf32>
    %45 = arith.negf %44 : vector<8x128xf32>
    %46 = math.exp %45 : vector<8x128xf32>
    %cst_51 = arith.constant 1.000000e+00 : f32
    %47 = vector.broadcast %cst_51 : f32 to vector<8x128xf32>
    %48 = arith.addf %47, %46 : vector<8x128xf32>
    %49 = arith.divf %47, %48 : vector<8x128xf32>
    %c0_52 = arith.constant 0 : index
    %c0_53 = arith.constant 0 : index
    %50 = vector.load %arg12[%c0_52, %c0_53] : memref<8x128xf32, #tpu.memory_space<vmem>>, vector<8x128xf32>
    tpu.vector_store %arg12[%c0_52, %c0_53], %49 {strides = array<i32>} : memref<8x128xf32, #tpu.memory_space<vmem>>, vector<8x128xf32>,
    return
  }
}

</mosaic_0001>

<llo_original>
// kernel: tpu_custom_call.1
$region0: #{tpu_custom_call.1}
  #allocation0 [shape = 'u32[]', space=smem, size = 0x4, offset = 0x4, fixed_abs, tag = 'smem constant byte address 0x4 - core index']
  #allocation1 [shape = 'u32[144,128]{1,0:T(1,128)}', space=vmem, size = 0x12000, scoped, tag = 'internal scratch']
  #allocation2 [shape = 'f32[64,512]{1,0:T(8,128)}', space=vmem, size = 0x20000, scoped, tag = 'scratch operand']
  #allocation3 [shape = 'f32[64,128]{1,0:T(8,128)}', space=vmem, size = 0x8000, scoped, tag = 'scratch operand']
  %s0 = inlined_call_operand.hbm [shape: f32[64,128], index: 0, kind: input, shape index: {}]
  %s1 = inlined_call_operand.hbm [shape: f32[128,512], index: 1, kind: input, shape index: {}]
  %s2 = inlined_call_operand.hbm [shape: f32[1,512], index: 2, kind: input, shape index: {}]
  %s3 = inlined_call_operand.hbm [shape: f32[2,128,512], index: 3, kind: input, shape index: {}]
  %s4 = inlined_call_operand.hbm [shape: f32[2,1,512], index: 4, kind: input, shape index: {}]
  %s5 = inlined_call_operand.hbm [shape: f32[2,128,512], index: 5, kind: input, shape index: {}]
  %s6 = inlined_call_operand.hbm [shape: f32[128,128], index: 6, kind: input, shape index: {}]
  %s7 = inlined_call_operand.vmem [shape: f32[1,128], index: 7, kind: input, shape index: {}]
  %s8 = inlined_call_operand.vmem [shape: f32[2,8,128], index: 8, kind: input, shape index: {}]
  %s9 = inlined_call_operand.vmem [shape: f32[2,8,128], index: 9, kind: input, shape index: {}]
  %s10 = inlined_call_operand.hbm [shape: f32[2,8,128], index: 10, kind: output, shape index: {0}]
  %s11 = inlined_call_operand.hbm [shape: f32[2,8,128], index: 11, kind: output, shape index: {1}]
  %s12 = inlined_call_operand.hbm [shape: f32[8,128], index: 12, kind: output, shape index: {2}]
  %13 = xla_tuple %s10, %s11, %s12
  %s14 = sld [smem:[#allocation0]]
  $region108: #{tpu_custom_call.1} parent=0
    _
  %s16 = ssub.s32 1, %s14
  %s17 = scalar_select 0, %s16, %s14
  $region1: #{tpu_custom_call.1} parent=0
    #allocation4 [shape = 'u8[32768]{0}', space=vmem, size = 0x8000, scoped, tag = 'input window, operand 0, single buffered']
    #allocation5 [shape = 's32[1]{0}', space=sflag, size = 0x4, scoped, tag = 'scoped memory for tpu_custom_call.1']
    #allocation6 [shape = 's32[1]{0}', space=sflag, size = 0x4, scoped, tag = 'scoped memory for tpu_custom_call.1']
    #allocation7 [shape = 'u8[262144]{0}', space=vmem, size = 0x40000, scoped, tag = 'input window, operand 1, single buffered']
    #allocation8 [shape = 's32[1]{0}', space=sflag, size = 0x4, scoped, tag = 'scoped memory for tpu_custom_call.1']
    #allocation9 [shape = 'u8[2048]{0}', space=vmem, size = 0x800, scoped, tag = 'input window, operand 2, single buffered']
    #allocation10 [shape = 'u8[524288]{0}', space=vmem, size = 0x80000, scoped, tag = 'input window, operand 3, single buffered']
    #allocation11 [shape = 's32[1]{0}', space=sflag, size = 0x4, scoped, tag = 'scoped memory for tpu_custom_call.1']
    #allocation12 [shape = 'u8[4096]{0}', space=vmem, size = 0x1000, scoped, tag = 'input window, operand 4, single buffered']
    #allocation13 [shape = 'u8[524288]{0}', space=vmem, size = 0x80000, scoped, tag = 'input window, operand 5, single buffered']
    #allocation14 [shape = 's32[1]{0}', space=sflag, size = 0x4, scoped, tag = 'scoped memory for tpu_custom_call.1']
    #allocation15 [shape = 'u8[65536]{0}', space=vmem, size = 0x10000, scoped, tag = 'input window, operand 6, single buffered']
    #allocation16 [shape = 'u8[8192]{0}', space=vmem, size = 0x2000, scoped, tag = 'output window, operand 0, single buffered']
    #allocation17 [shape = 'u8[8192]{0}', space=vmem, size = 0x2000, scoped, tag = 'output window, operand 1, single buffered']
    #allocation18 [shape = 's32[1]{0}', space=sflag, size = 0x4, scoped, tag = 'scoped memory for tpu_custom_call.1']
    #allocation19 [shape = 'u8[4096]{0}', space=vmem, size = 0x1000, scoped, tag = 'output window, operand 2, single buffered']
    %18 = vsyncpa [#allocation5], 0
    %19 = vsyncpa [#allocation8], 0
    %20 = vsyncpa [#allocation11], 0
    %21 = vsyncpa [#allocation14], 0
    %22 = vsyncpa [#allocation6], 0
    %23 = vsyncpa [#allocation18], 0
    // Predicated region
    $region2: #{tpu_custom_call.1} parent=1 // pred_check
      _
    $region3: #{tpu_custom_call.1} parent=1 // pred_check_branch
      %25 = sbr.rel (0) target = $region5
    $region4: #{tpu_custom_call.1} parent=1 // pred_region
      %s27 = ssub.s32 1024, 1024
      %28 = vsyncadd [#allocation5], %s27
      %s29 = sshll.u32 [#allocation4], 4
      %s30 = int_to_ptr.vmem [resolvable:$true] %s29
      %35 = dma.hbm_to_vmem [thread:$0]  %s0, 1024, %s30, [#allocation5], 128, 128, 8
    $region5: #{tpu_custom_call.1} parent=1 // pred_fallthru
      _
    // Predicated region
    $region6: #{tpu_custom_call.1} parent=1 // pred_check
      _
    $region7: #{tpu_custom_call.1} parent=1 // pred_check_branch
      %37 = sbr.rel (0) target = $region9
    $region8: #{tpu_custom_call.1} parent=1 // pred_region
      %s39 = ssub.s32 8192, 8192
      %40 = vsyncadd [#allocation8], %s39
      %s41 = sshll.u32 [#allocation7], 4
      %s42 = int_to_ptr.vmem [resolvable:$true] %s41
      %47 = dma.hbm_to_vmem [thread:$0]  %s1, 8192, %s42, [#allocation8], 512, 512, 32
    $region9: #{tpu_custom_call.1} parent=1 // pred_fallthru
      _
    // Predicated region
    $region10: #{tpu_custom_call.1} parent=1 // pred_check
      _
    $region11: #{tpu_custom_call.1} parent=1 // pred_check_branch
      %49 = sbr.rel (0) target = $region13
    $region12: #{tpu_custom_call.1} parent=1 // pred_region
      %s51 = ssub.s32 64, 64
      %52 = vsyncadd [#allocation8], %s51
      %s54 = sshll.u32 [#allocation9], 4
      %s55 = int_to_ptr.vmem [resolvable:$true] %s54
      %57 = dma.hbm_to_vmem [thread:$0]  %s2, 64, %s55, [#allocation8]
    $region13: #{tpu_custom_call.1} parent=1 // pred_fallthru
      _
    // Predicated region
    $region14: #{tpu_custom_call.1} parent=1 // pred_check
      _
    $region15: #{tpu_custom_call.1} parent=1 // pred_check_branch
      %59 = sbr.rel (0) target = $region17
    $region16: #{tpu_custom_call.1} parent=1 // pred_region
      %s61 = ssub.s32 16384, 16384
      %62 = vsyncadd [#allocation11], %s61
      %s63 = sshll.u32 [#allocation10], 4
      %s64 = int_to_ptr.vmem [resolvable:$true] %s63
      %69 = dma.hbm_to_vmem [thread:$0]  %s3, 16384, %s64, [#allocation11], 512, 512, 32
    $region17: #{tpu_custom_call.1} parent=1 // pred_fallthru
      _
    // Predicated region
    $region18: #{tpu_custom_call.1} parent=1 // pred_check
      _
    $region19: #{tpu_custom_call.1} parent=1 // pred_check_branch
      %71 = sbr.rel (0) target = $region21
    $region20: #{tpu_custom_call.1} parent=1 // pred_region
      %s73 = ssub.s32 128, 128
      %74 = vsyncadd [#allocation11], %s73
      %s75 = sshll.u32 [#allocation12], 4
      %s76 = int_to_ptr.vmem [resolvable:$true] %s75
      %81 = dma.hbm_to_vmem [thread:$0]  %s4, 128, %s76, [#allocation11], 64, 64, 4
    $region21: #{tpu_custom_call.1} parent=1 // pred_fallthru
      _
    // Predicated region
    $region22: #{tpu_custom_call.1} parent=1 // pred_check
      _
    $region23: #{tpu_custom_call.1} parent=1 // pred_check_branch
      %83 = sbr.rel (0) target = $region25
    $region24: #{tpu_custom_call.1} parent=1 // pred_region
      %s85 = ssub.s32 16384, 16384
      %86 = vsyncadd [#allocation14], %s85
      %s87 = sshll.u32 [#allocation13], 4
      %s88 = int_to_ptr.vmem [resolvable:$true] %s87
      %93 = dma.hbm_to_vmem [thread:$0]  %s5, 16384, %s88, [#allocation14], 512, 512, 32
    $region25: #{tpu_custom_call.1} parent=1 // pred_fallthru
      _
    // Predicated region
    $region26: #{tpu_custom_call.1} parent=1 // pred_check
      _
    $region27: #{tpu_custom_call.1} parent=1 // pred_check_branch
      %95 = sbr.rel (0) target = $region29
    $region28: #{tpu_custom_call.1} parent=1 // pred_region
      %s97 = ssub.s32 2048, 2048
      %98 = vsyncadd [#allocation14], %s97
      %s99 = sshll.u32 [#allocation15], 4
      %s100 = int_to_ptr.vmem [resolvable:$true] %s99
      %105 = dma.hbm_to_vmem [thread:$0]  %s6, 2048, %s100, [#allocation14], 128, 128, 8
    $region29: #{tpu_custom_call.1} parent=1 // pred_fallthru
      _
    // Predicated region
    $region30: #{tpu_custom_call.1} parent=1 // pred_check
      _
    $region31: #{tpu_custom_call.1} parent=1 // pred_check_branch
      %107 = sbr.rel (0) target = $region33
    $region32: #{tpu_custom_call.1} parent=1 // pred_region
      _
    $region33: #{tpu_custom_call.1} parent=1 // pred_fallthru
      _
    // Predicated region
    $region34: #{tpu_custom_call.1} parent=1 // pred_check
      _
    $region35: #{tpu_custom_call.1} parent=1 // pred_check_branch
      %109 = sbr.rel (0) target = $region37
    $region36: #{tpu_custom_call.1} parent=1 // pred_region
      _
    $region37: #{tpu_custom_call.1} parent=1 // pred_fallthru
      _
    // Predicated region
    $region38: #{tpu_custom_call.1} parent=1 // pred_check
      _
    $region39: #{tpu_custom_call.1} parent=1 // pred_check_branch
      %111 = sbr.rel (0) target = $region41
    $region40: #{tpu_custom_call.1} parent=1 // pred_region
      _
    $region41: #{tpu_custom_call.1} parent=1 // pred_fallthru
      _
    // Predicated region
    $region42: #{tpu_custom_call.1} parent=1 // pred_check
      _
    $region43: #{tpu_custom_call.1} parent=1 // pred_check_branch
      %113 = sbr.rel (0) target = $region45
    $region44: #{tpu_custom_call.1} parent=1 // pred_region
      %114 = dma.done [#allocation5], 1024
    $region45: #{tpu_custom_call.1} parent=1 // pred_fallthru
      _
    // Predicated region
    $region46: #{tpu_custom_call.1} parent=1 // pred_check
      _
    $region47: #{tpu_custom_call.1} parent=1 // pred_check_branch
      %116 = sbr.rel (0) target = $region49
    $region48: #{tpu_custom_call.1} parent=1 // pred_region
      %117 = dma.done [#allocation8], 8192
    $region49: #{tpu_custom_call.1} parent=1 // pred_fallthru
      _
    // Predicated region
    $region50: #{tpu_custom_call.1} parent=1 // pred_check
      _
    $region51: #{tpu_custom_call.1} parent=1 // pred_check_branch
      %119 = sbr.rel (0) target = $region53
    $region52: #{tpu_custom_call.1} parent=1 // pred_region
      %120 = dma.done [#allocation8], 64
    $region53: #{tpu_custom_call.1} parent=1 // pred_fallthru
      _
    // Predicated region
    $region54: #{tpu_custom_call.1} parent=1 // pred_check
      _
    $region55: #{tpu_custom_call.1} parent=1 // pred_check_branch
      %122 = sbr.rel (0) target = $region57
    $region56: #{tpu_custom_call.1} parent=1 // pred_region
      %123 = dma.done [#allocation11], 16384
    $region57: #{tpu_custom_call.1} parent=1 // pred_fallthru
      _
    // Predicated region
    $region58: #{tpu_custom_call.1} parent=1 // pred_check
      _
    $region59: #{tpu_custom_call.1} parent=1 // pred_check_branch
      %125 = sbr.rel (0) target = $region61
    $region60: #{tpu_custom_call.1} parent=1 // pred_region
      %126 = dma.done [#allocation11], 128
    $region61: #{tpu_custom_call.1} parent=1 // pred_fallthru
      _
    // Predicated region
    $region62: #{tpu_custom_call.1} parent=1 // pred_check
      _
    $region63: #{tpu_custom_call.1} parent=1 // pred_check_branch
      %128 = sbr.rel (0) target = $region65
    $region64: #{tpu_custom_call.1} parent=1 // pred_region
      %129 = dma.done [#allocation14], 16384
    $region65: #{tpu_custom_call.1} parent=1 // pred_fallthru
      _
    // Predicated region
    $region66: #{tpu_custom_call.1} parent=1 // pred_check
      _
    $region67: #{tpu_custom_call.1} parent=1 // pred_check_branch
      %131 = sbr.rel (0) target = $region69
    $region68: #{tpu_custom_call.1} parent=1 // pred_region
      %132 = dma.done [#allocation14], 2048
    $region69: #{tpu_custom_call.1} parent=1 // pred_fallthru
      _
    %v133 = vld [vmem:[#allocation4] sm:$0xff]
    %v134 = vld [vmem:[#allocation4 + $0x8] sm:$0xff]
    %v135 = vld [vmem:[#allocation4 + $0x10] sm:$0xff]
    %v136 = vld [vmem:[#allocation4 + $0x18] sm:$0xff]
    %v137 = vld [vmem:[#allocation4 + $0x20] sm:$0xff]
    %v138 = vld [vmem:[#allocation4 + $0x28] sm:$0xff]
    %v139 = vld [vmem:[#allocation4 + $0x30] sm:$0xff]
    %v140 = vld [vmem:[#allocation4 + $0x38] sm:$0xff]
    %v141 = vld [vmem:[#allocation7] sm:$0xff]
    %v142 = vld [vmem:[#allocation7 + $0x8] sm:$0xff]
    %v143 = vld [vmem:[#allocation7 + $0x10] sm:$0xff]
    %v144 = vld [vmem:[#allocation7 + $0x18] sm:$0xff]
    %v145 = vld [vmem:[#allocation7 + $0x20] sm:$0xff]
    %v146 = vld [vmem:[#allocation7 + $0x28] sm:$0xff]
    %v147 = vld [vmem:[#allocation7 + $0x30] sm:$0xff]
    %v148 = vld [vmem:[#allocation7 + $0x38] sm:$0xff]
    %v149 = vld [vmem:[#allocation7 + $0x40] sm:$0xff]
    %v150 = vld [vmem:[#allocation7 + $0x48] sm:$0xff]
    %v151 = vld [vmem:[#allocation7 + $0x50] sm:$0xff]
    %v152 = vld [vmem:[#allocation7 + $0x58] sm:$0xff]
    %v153 = vld [vmem:[#allocation7 + $0x60] sm:$0xff]
    %v154 = vld [vmem:[#allocation7 + $0x68] sm:$0xff]
    %v155 = vld [vmem:[#allocation7 + $0x70] sm:$0xff]
    %v156 = vld [vmem:[#allocation7 + $0x78] sm:$0xff]
    %v157 = vld [vmem:[#allocation7 + $0x80] sm:$0xff]
    %v158 = vld [vmem:[#allocation7 + $0x88] sm:$0xff]
    %v159 = vld [vmem:[#allocation7 + $0x90] sm:$0xff]
    %v160 = vld [vmem:[#allocation7 + $0x98] sm:$0xff]
    %v161 = vld [vmem:[#allocation7 + $0xa0] sm:$0xff]
    %v162 = vld [vmem:[#allocation7 + $0xa8] sm:$0xff]
    %v163 = vld [vmem:[#allocation7 + $0xb0] sm:$0xff]
    %v164 = vld [vmem:[#allocation7 + $0xb8] sm:$0xff]
    %v165 = vld [vmem:[#allocation7 + $0xc0] sm:$0xff]
    %v166 = vld [vmem:[#allocation7 + $0xc8] sm:$0xff]
    %v167 = vld [vmem:[#allocation7 + $0xd0] sm:$0xff]
    %v168 = vld [vmem:[#allocation7 + $0xd8] sm:$0xff]
    %v169 = vld [vmem:[#allocation7 + $0xe0] sm:$0xff]
    %v170 = vld [vmem:[#allocation7 + $0xe8] sm:$0xff]
    %v171 = vld [vmem:[#allocation7 + $0xf0] sm:$0xff]
    %v172 = vld [vmem:[#allocation7 + $0xf8] sm:$0xff]
    %v173 = vld [vmem:[#allocation7 + $0x100] sm:$0xff]
    %v174 = vld [vmem:[#allocation7 + $0x108] sm:$0xff]
    %v175 = vld [vmem:[#allocation7 + $0x110] sm:$0xff]
    %v176 = vld [vmem:[#allocation7 + $0x118] sm:$0xff]
    %v177 = vld [vmem:[#allocation7 + $0x120] sm:$0xff]
    %v178 = vld [vmem:[#allocation7 + $0x128] sm:$0xff]
    %v179 = vld [vmem:[#allocation7 + $0x130] sm:$0xff]
    %v180 = vld [vmem:[#allocation7 + $0x138] sm:$0xff]
    %v181 = vld [vmem:[#allocation7 + $0x140] sm:$0xff]
    %v182 = vld [vmem:[#allocation7 + $0x148] sm:$0xff]
    %v183 = vld [vmem:[#allocation7 + $0x150] sm:$0xff]
    %v184 = vld [vmem:[#allocation7 + $0x158] sm:$0xff]
    %v185 = vld [vmem:[#allocation7 + $0x160] sm:$0xff]
    %v186 = vld [vmem:[#allocation7 + $0x168] sm:$0xff]
    %v187 = vld [vmem:[#allocation7 + $0x170] sm:$0xff]
    %v188 = vld [vmem:[#allocation7 + $0x178] sm:$0xff]
    %v189 = vld [vmem:[#allocation7 + $0x180] sm:$0xff]
    %v190 = vld [vmem:[#allocation7 + $0x188] sm:$0xff]
    %v191 = vld [vmem:[#allocation7 + $0x190] sm:$0xff]
    %v192 = vld [vmem:[#allocation7 + $0x198] sm:$0xff]
    %v193 = vld [vmem:[#allocation7 + $0x1a0] sm:$0xff]
    %v194 = vld [vmem:[#allocation7 + $0x1a8] sm:$0xff]
    %v195 = vld [vmem:[#allocation7 + $0x1b0] sm:$0xff]
    %v196 = vld [vmem:[#allocation7 + $0x1b8] sm:$0xff]
    %v197 = vld [vmem:[#allocation7 + $0x1c0] sm:$0xff]
    %v198 = vld [vmem:[#allocation7 + $0x1c8] sm:$0xff]
    %v199 = vld [vmem:[#allocation7 + $0x1d0] sm:$0xff]
    %v200 = vld [vmem:[#allocation7 + $0x1d8] sm:$0xff]
    %v201 = vld [vmem:[#allocation7 + $0x1e0] sm:$0xff]
    %v202 = vld [vmem:[#allocation7 + $0x1e8] sm:$0xff]
    %v203 = vld [vmem:[#allocation7 + $0x1f0] sm:$0xff]
    %v204 = vld [vmem:[#allocation7 + $0x1f8] sm:$0xff]
    %v205 = vld [vmem:[#allocation9] sm:$0xf]
    %v207 = vlaneseq
    %v208 = vshrl.u32 %v207, 7
    %v209 = vsub.s32 0, %v208
    %v210 = vrot.slane %v205, %v209
    %v211 = vlaneseq
    %v212 = vshrl.u32 %v211, 7
    %v213 = vsub.s32 1, %v212
    %v214 = vrot.slane %v205, %v213
    %v215 = vlaneseq
    %v216 = vshrl.u32 %v215, 7
    %v217 = vsub.s32 2, %v216
    %v218 = vrot.slane %v205, %v217
    %v219 = vlaneseq
    %v220 = vshrl.u32 %v219, 7
    %v221 = vsub.s32 3, %v220
    %v222 = vrot.slane %v205, %v221
    %227 = vmatprep.subr.mxu0 %v142
    %228 = vmatpush1.msra.mxu0 %v141
    %229 = vmatprep.subr.mxu0 %v146
    %230 = vmatpush1.msra.mxu0 %v145
    %231 = vmatprep.subr.mxu0 %v150
    %232 = vmatpush1.msra.mxu0 %v149
    %233 = vmatprep.subr.mxu0 %v154
    %234 = vmatpush1.msra.mxu0 %v153
    %235 = vmatprep.subr.mxu0 %v158
    %236 = vmatpush1.msra.mxu0 %v157
    %237 = vmatprep.subr.mxu0 %v162
    %238 = vmatpush1.msra.mxu0 %v161
    %239 = vmatprep.subr.mxu0 %v166
    %240 = vmatpush1.msra.mxu0 %v165
    %241 = vmatprep.subr.mxu0 %v170
    %242 = vmatpush1.msra.mxu0 %v169
    %243 = vmatprep.subr.mxu0 %v174
    %244 = vmatpush1.msra.mxu0 %v173
    %245 = vmatprep.subr.mxu0 %v178
    %246 = vmatpush1.msra.mxu0 %v177
    %247 = vmatprep.subr.mxu0 %v182
    %248 = vmatpush1.msra.mxu0 %v181
    %249 = vmatprep.subr.mxu0 %v186
    %250 = vmatpush1.msra.mxu0 %v185
    %251 = vmatprep.subr.mxu0 %v190
    %252 = vmatpush1.msra.mxu0 %v189
    %253 = vmatprep.subr.mxu0 %v194
    %254 = vmatpush1.msra.mxu0 %v193
    %255 = vmatprep.subr.mxu0 %v198
    %256 = vmatpush1.msra.mxu0 %v197
    %257 = vmatprep.subr.mxu0 %v202
    %258 = vmatpush1.msra.mxu0 %v201
    %259 = vmatprep.subr.mxu0 0.0
    %260 = vmatpush1.msra.mxu0 0.0
    %261 = vmatprep.subr.mxu0 0.0
    %262 = vmatpush1.msra.mxu0 0.0
    %263 = vmatprep.subr.mxu0 0.0
    %264 = vmatpush1.msra.mxu0 0.0
    %265 = vmatprep.subr.mxu0 0.0
    %266 = vmatpush1.msra.mxu0 0.0
    %267 = vmatprep.subr.mxu0 0.0
    %268 = vmatpush1.msra.mxu0 0.0
    %269 = vmatprep.subr.mxu0 0.0
    %270 = vmatpush1.msra.mxu0 0.0
    %271 = vmatprep.subr.mxu0 0.0
    %272 = vmatpush1.msra.mxu0 0.0
    %273 = vmatprep.subr.mxu0 0.0
    %274 = vmatpush1.msra.mxu0 0.0
    %275 = vmatprep.subr.mxu0 0.0
    %276 = vmatpush1.msra.mxu0 0.0
    %277 = vmatprep.subr.mxu0 0.0
    %278 = vmatpush1.msra.mxu0 0.0
    %279 = vmatprep.subr.mxu0 0.0
    %280 = vmatpush1.msra.mxu0 0.0
    %281 = vmatprep.subr.mxu0 0.0
    %282 = vmatpush1.msra.mxu0 0.0
    %283 = vmatprep.subr.mxu0 0.0
    %284 = vmatpush1.msra.mxu0 0.0
    %285 = vmatprep.subr.mxu0 0.0
    %286 = vmatpush1.msra.mxu0 0.0
    %287 = vmatprep.subr.mxu0 0.0
    %288 = vmatpush1.msra.mxu0 0.0
    %289 = vmatprep.subr.mxu0 0.0
    %290 = vmatpush1.msra.mxu0 0.0
    %291 = vmatprep.mubr.f32.mxu0 0.0
    %292 = vmatmul.mubr.f32.gmra.mrb[0].mxu0 %v133
    %v293 = vpop.f32.mrb[0].mxu0
    %v294 = vadd.f32 %v210, %v293
    %v295 = vpop.f32.mrb[0].mxu0
    %v296 = vadd.f32 %v214, %v295
    %297 = vmatprep.mubr.f32.mxu0 0.0
    %298 = vmatmul.mubr.f32.gmra.mrb[0].mxu0 %v134
    %v299 = vpop.f32.mrb[0].mxu0
    %v300 = vadd.f32 %v210, %v299
    %v301 = vpop.f32.mrb[0].mxu0
    %v302 = vadd.f32 %v214, %v301
    %303 = vmatprep.mubr.f32.mxu0 0.0
    %304 = vmatmul.mubr.f32.gmra.mrb[0].mxu0 %v135
    %v305 = vpop.f32.mrb[0].mxu0
    %v306 = vadd.f32 %v210, %v305
    %v307 = vpop.f32.mrb[0].mxu0
    %v308 = vadd.f32 %v214, %v307
    %309 = vmatprep.mubr.f32.mxu0 0.0
    %310 = vmatmul.mubr.f32.gmra.mrb[0].mxu0 %v136
    %v311 = vpop.f32.mrb[0].mxu0
    %v312 = vadd.f32 %v210, %v311
    %v313 = vpop.f32.mrb[0].mxu0
    %v314 = vadd.f32 %v214, %v313
    %315 = vmatprep.mubr.f32.mxu0 0.0
    %316 = vmatmul.mubr.f32.gmra.mrb[0].mxu0 %v137
    %v317 = vpop.f32.mrb[0].mxu0
    %v318 = vadd.f32 %v210, %v317
    %v319 = vpop.f32.mrb[0].mxu0
    %v320 = vadd.f32 %v214, %v319
    %321 = vmatprep.mubr.f32.mxu0 0.0
    %322 = vmatmul.mubr.f32.gmra.mrb[0].mxu0 %v138
    %v323 = vpop.f32.mrb[0].mxu0
    %v324 = vadd.f32 %v210, %v323
    %v325 = vpop.f32.mrb[0].mxu0
    %v326 = vadd.f32 %v214, %v325
    %327 = vmatprep.mubr.f32.mxu0 0.0
    %328 = vmatmul.mubr.f32.gmra.mrb[0].mxu0 %v139
    %v329 = vpop.f32.mrb[0].mxu0
    %v330 = vadd.f32 %v210, %v329
    %v331 = vpop.f32.mrb[0].mxu0
    %v332 = vadd.f32 %v214, %v331
    %333 = vmatprep.mubr.f32.mxu0 0.0
    %334 = vmatmul.mubr.f32.gmra.mrb[0].mxu0 %v140
    %v335 = vpop.f32.mrb[0].mxu0
    %v336 = vadd.f32 %v210, %v335
    %v337 = vpop.f32.mrb[0].mxu0
    %v338 = vadd.f32 %v214, %v337
    %339 = vdwg.mxu0
    %340 = vmatprep.subr.mxu0 %v144
    %341 = vmatpush1.msra.mxu0 %v143
    %342 = vmatprep.subr.mxu0 %v148
    %343 = vmatpush1.msra.mxu0 %v147
    %344 = vmatprep.subr.mxu0 %v152
    %345 = vmatpush1.msra.mxu0 %v151
    %346 = vmatprep.subr.mxu0 %v156
    %347 = vmatpush1.msra.mxu0 %v155
    %348 = vmatprep.subr.mxu0 %v160
    %349 = vmatpush1.msra.mxu0 %v159
    %350 = vmatprep.subr.mxu0 %v164
    %351 = vmatpush1.msra.mxu0 %v163
    %352 = vmatprep.subr.mxu0 %v168
    %353 = vmatpush1.msra.mxu0 %v167
    %354 = vmatprep.subr.mxu0 %v172
    %355 = vmatpush1.msra.mxu0 %v171
    %356 = vmatprep.subr.mxu0 %v176
    %357 = vmatpush1.msra.mxu0 %v175
    %358 = vmatprep.subr.mxu0 %v180
    %359 = vmatpush1.msra.mxu0 %v179
    %360 = vmatprep.subr.mxu0 %v184
    %361 = vmatpush1.msra.mxu0 %v183
    %362 = vmatprep.subr.mxu0 %v188
    %363 = vmatpush1.msra.mxu0 %v187
    %364 = vmatprep.subr.mxu0 %v192
    %365 = vmatpush1.msra.mxu0 %v191
    %366 = vmatprep.subr.mxu0 %v196
    %367 = vmatpush1.msra.mxu0 %v195
    %368 = vmatprep.subr.mxu0 %v200
    %369 = vmatpush1.msra.mxu0 %v199
    %370 = vmatprep.subr.mxu0 %v204
    %371 = vmatpush1.msra.mxu0 %v203
    %372 = vmatprep.subr.mxu0 0.0
    %373 = vmatpush1.msra.mxu0 0.0
    %374 = vmatprep.subr.mxu0 0.0
    %375 = vmatpush1.msra.mxu0 0.0
    %376 = vmatprep.subr.mxu0 0.0
    %377 = vmatpush1.msra.mxu0 0.0
    %378 = vmatprep.subr.mxu0 0.0
    %379 = vmatpush1.msra.mxu0 0.0
    %380 = vmatprep.subr.mxu0 0.0
    %381 = vmatpush1.msra.mxu0 0.0
    %382 = vmatprep.subr.mxu0 0.0
    %383 = vmatpush1.msra.mxu0 0.0
    %384 = vmatprep.subr.mxu0 0.0
    %385 = vmatpush1.msra.mxu0 0.0
    %386 = vmatprep.subr.mxu0 0.0
    %387 = vmatpush1.msra.mxu0 0.0
    %388 = vmatprep.subr.mxu0 0.0
    %389 = vmatpush1.msra.mxu0 0.0
    %390 = vmatprep.subr.mxu0 0.0
    %391 = vmatpush1.msra.mxu0 0.0
    %392 = vmatprep.subr.mxu0 0.0
    %393 = vmatpush1.msra.mxu0 0.0
    %394 = vmatprep.subr.mxu0 0.0
    %395 = vmatpush1.msra.mxu0 0.0
    %396 = vmatprep.subr.mxu0 0.0
    %397 = vmatpush1.msra.mxu0 0.0
    %398 = vmatprep.subr.mxu0 0.0
    %399 = vmatpush1.msra.mxu0 0.0
    %400 = vmatprep.subr.mxu0 0.0
    %401 = vmatpush1.msra.mxu0 0.0
    %402 = vmatprep.subr.mxu0 0.0
    %403 = vmatpush1.msra.mxu0 0.0
    %404 = vmatprep.mubr.f32.mxu0 0.0
    %405 = vmatmul.mubr.f32.gmra.mrb[0].mxu0 %v133
    %v406 = vpop.f32.mrb[0].mxu0
    %v407 = vadd.f32 %v218, %v406
    %v408 = vpop.f32.mrb[0].mxu0
    %v409 = vadd.f32 %v222, %v408
    %410 = vmatprep.mubr.f32.mxu0 0.0
    %411 = vmatmul.mubr.f32.gmra.mrb[0].mxu0 %v134
    %v412 = vpop.f32.mrb[0].mxu0
    %v413 = vadd.f32 %v218, %v412
    %v414 = vpop.f32.mrb[0].mxu0
    %v415 = vadd.f32 %v222, %v414
    %416 = vmatprep.mubr.f32.mxu0 0.0
    %417 = vmatmul.mubr.f32.gmra.mrb[0].mxu0 %v135
    %v418 = vpop.f32.mrb[0].mxu0
    %v419 = vadd.f32 %v218, %v418
    %v420 = vpop.f32.mrb[0].mxu0
    %v421 = vadd.f32 %v222, %v420
    %422 = vmatprep.mubr.f32.mxu0 0.0
    %423 = vmatmul.mubr.f32.gmra.mrb[0].mxu0 %v136
    %v424 = vpop.f32.mrb[0].mxu0
    %v425 = vadd.f32 %v218, %v424
    %v426 = vpop.f32.mrb[0].mxu0
    %v427 = vadd.f32 %v222, %v426
    %428 = vmatprep.mubr.f32.mxu0 0.0
    %429 = vmatmul.mubr.f32.gmra.mrb[0].mxu0 %v137
    %v430 = vpop.f32.mrb[0].mxu0
    %v431 = vadd.f32 %v218, %v430
    %v432 = vpop.f32.mrb[0].mxu0
    %v433 = vadd.f32 %v222, %v432
    %434 = vmatprep.mubr.f32.mxu0 0.0
    %435 = vmatmul.mubr.f32.gmra.mrb[0].mxu0 %v138
    %v436 = vpop.f32.mrb[0].mxu0
    %v437 = vadd.f32 %v218, %v436
    %v438 = vpop.f32.mrb[0].mxu0
    %v439 = vadd.f32 %v222, %v438
    %440 = vmatprep.mubr.f32.mxu0 0.0
    %441 = vmatmul.mubr.f32.gmra.mrb[0].mxu0 %v139
    %v442 = vpop.f32.mrb[0].mxu0
    %v443 = vadd.f32 %v218, %v442
    %v444 = vpop.f32.mrb[0].mxu0
    %v445 = vadd.f32 %v222, %v444
    %446 = vmatprep.mubr.f32.mxu0 0.0
    %447 = vmatmul.mubr.f32.gmra.mrb[0].mxu0 %v140
    %v448 = vpop.f32.mrb[0].mxu0
    %v449 = vadd.f32 %v218, %v448
    %v450 = vpop.f32.mrb[0].mxu0
    %v451 = vadd.f32 %v222, %v450
    %452 = vdwg.mxu0
    %453 = vst [vmem:[#allocation2] sm:$0xff] %v294
    %454 = vst [vmem:[#allocation2 + $0x8] sm:$0xff] %v296
    %455 = vst [vmem:[#allocation2 + $0x10] sm:$0xff] %v407
    %456 = vst [vmem:[#allocation2 + $0x18] sm:$0xff] %v409
    %457 = vst [vmem:[#allocation2 + $0x20] sm:$0xff] %v300
    %458 = vst [vmem:[#allocation2 + $0x28] sm:$0xff] %v302
    %459 = vst [vmem:[#allocation2 + $0x30] sm:$0xff] %v413
    %460 = vst [vmem:[#allocation2 + $0x38] sm:$0xff] %v415
    %461 = vst [vmem:[#allocation2 + $0x40] sm:$0xff] %v306
    %462 = vst [vmem:[#allocation2 + $0x48] sm:$0xff] %v308
    %463 = vst [vmem:[#allocation2 + $0x50] sm:$0xff] %v419
    %464 = vst [vmem:[#allocation2 + $0x58] sm:$0xff] %v421
    %465 = vst [vmem:[#allocation2 + $0x60] sm:$0xff] %v312
    %466 = vst [vmem:[#allocation2 + $0x68] sm:$0xff] %v314
    %467 = vst [vmem:[#allocation2 + $0x70] sm:$0xff] %v425
    %468 = vst [vmem:[#allocation2 + $0x78] sm:$0xff] %v427
    %469 = vst [vmem:[#allocation2 + $0x80] sm:$0xff] %v318
    %470 = vst [vmem:[#allocation2 + $0x88] sm:$0xff] %v320
    %471 = vst [vmem:[#allocation2 + $0x90] sm:$0xff] %v431
    %472 = vst [vmem:[#allocation2 + $0x98] sm:$0xff] %v433
    %473 = vst [vmem:[#allocation2 + $0xa0] sm:$0xff] %v324
    %474 = vst [vmem:[#allocation2 + $0xa8] sm:$0xff] %v326
    %475 = vst [vmem:[#allocation2 + $0xb0] sm:$0xff] %v437
    %476 = vst [vmem:[#allocation2 + $0xb8] sm:$0xff] %v439
    %477 = vst [vmem:[#allocation2 + $0xc0] sm:$0xff] %v330
    %478 = vst [vmem:[#allocation2 + $0xc8] sm:$0xff] %v332
    %479 = vst [vmem:[#allocation2 + $0xd0] sm:$0xff] %v443
    %480 = vst [vmem:[#allocation2 + $0xd8] sm:$0xff] %v445
    %481 = vst [vmem:[#allocation2 + $0xe0] sm:$0xff] %v336
    %482 = vst [vmem:[#allocation2 + $0xe8] sm:$0xff] %v338
    %483 = vst [vmem:[#allocation2 + $0xf0] sm:$0xff] %v449
    %484 = vst [vmem:[#allocation2 + $0xf8] sm:$0xff] %v451
    %v485 = vld [vmem:[%s8] sm:$0xff]
    %v486 = vld [vmem:[%s9] sm:$0xff]
    loop: start=0, step=1, limit=8
    $region70: #{tpu_custom_call.1} parent=1 // loop_pre_header
      _
    $region71: #{tpu_custom_call.1} parent=1 // loop_header
      %s488 = sphi 0, %s492
      %p489 = scmp.ge.s32.totalorder %s488, 8
      %v493 = vphi %v485, %v738
      %v494 = vphi %v486, %v736
    $region72: #{tpu_custom_call.1} parent=1 // loop_header_branch
      %491 = sbr.rel (%p489) target = $region76
    $region73: #{tpu_custom_call.1} parent=1 // loop_body
      %s495 = smul.u32 %s488, 8
      %s496 = sshra.s32 %s495, 3
      %s497 = sand.u32 %s495, 7
      %s498 = smul.u32 %s496, 4
      %s499 = smul.addr %s498, 8
      %s500 = scalar_lea.vmem [#allocation2], %s499
      %v501 = vld [vmem:[%s500] sm:$0xff]
      %v502 = vld [vmem:[%s500 + $0x8] sm:$0xff]
      %v503 = vld [vmem:[%s500 + $0x10] sm:$0xff]
      %v504 = vld [vmem:[%s500 + $0x18] sm:$0xff]
      %v505 = vld [vmem:[#allocation13] sm:$0xff]
      %v506 = vld [vmem:[#allocation13 + $0x8] sm:$0xff]
      %v507 = vld [vmem:[#allocation13 + $0x10] sm:$0xff]
      %v508 = vld [vmem:[#allocation13 + $0x18] sm:$0xff]
      %v509 = vld [vmem:[#allocation13 + $0x20] sm:$0xff]
      %v510 = vld [vmem:[#allocation13 + $0x28] sm:$0xff]
      %v511 = vld [vmem:[#allocation13 + $0x30] sm:$0xff]
      %v512 = vld [vmem:[#allocation13 + $0x38] sm:$0xff]
      %v513 = vld [vmem:[#allocation13 + $0x40] sm:$0xff]
      %v514 = vld [vmem:[#allocation13 + $0x48] sm:$0xff]
      %v515 = vld [vmem:[#allocation13 + $0x50] sm:$0xff]
      %v516 = vld [vmem:[#allocation13 + $0x58] sm:$0xff]
      %v517 = vld [vmem:[#allocation13 + $0x60] sm:$0xff]
      %v518 = vld [vmem:[#allocation13 + $0x68] sm:$0xff]
      %v519 = vld [vmem:[#allocation13 + $0x70] sm:$0xff]
      %v520 = vld [vmem:[#allocation13 + $0x78] sm:$0xff]
      %v521 = vld [vmem:[#allocation13 + $0x80] sm:$0xff]
      %v522 = vld [vmem:[#allocation13 + $0x88] sm:$0xff]
      %v523 = vld [vmem:[#allocation13 + $0x90] sm:$0xff]
      %v524 = vld [vmem:[#allocation13 + $0x98] sm:$0xff]
      %v525 = vld [vmem:[#allocation13 + $0xa0] sm:$0xff]
      %v526 = vld [vmem:[#allocation13 + $0xa8] sm:$0xff]
      %v527 = vld [vmem:[#allocation13 + $0xb0] sm:$0xff]
      %v528 = vld [vmem:[#allocation13 + $0xb8] sm:$0xff]
      %v529 = vld [vmem:[#allocation13 + $0xc0] sm:$0xff]
      %v530 = vld [vmem:[#allocation13 + $0xc8] sm:$0xff]
      %v531 = vld [vmem:[#allocation13 + $0xd0] sm:$0xff]
      %v532 = vld [vmem:[#allocation13 + $0xd8] sm:$0xff]
      %v533 = vld [vmem:[#allocation13 + $0xe0] sm:$0xff]
      %v534 = vld [vmem:[#allocation13 + $0xe8] sm:$0xff]
      %v535 = vld [vmem:[#allocation13 + $0xf0] sm:$0xff]
      %v536 = vld [vmem:[#allocation13 + $0xf8] sm:$0xff]
      %v537 = vld [vmem:[#allocation13 + $0x100] sm:$0xff]
      %v538 = vld [vmem:[#allocation13 + $0x108] sm:$0xff]
      %v539 = vld [vmem:[#allocation13 + $0x110] sm:$0xff]
      %v540 = vld [vmem:[#allocation13 + $0x118] sm:$0xff]
      %v541 = vld [vmem:[#allocation13 + $0x120] sm:$0xff]
      %v542 = vld [vmem:[#allocation13 + $0x128] sm:$0xff]
      %v543 = vld [vmem:[#allocation13 + $0x130] sm:$0xff]
      %v544 = vld [vmem:[#allocation13 + $0x138] sm:$0xff]
      %v545 = vld [vmem:[#allocation13 + $0x140] sm:$0xff]
      %v546 = vld [vmem:[#allocation13 + $0x148] sm:$0xff]
      %v547 = vld [vmem:[#allocation13 + $0x150] sm:$0xff]
      %v548 = vld [vmem:[#allocation13 + $0x158] sm:$0xff]
      %v549 = vld [vmem:[#allocation13 + $0x160] sm:$0xff]
      %v550 = vld [vmem:[#allocation13 + $0x168] sm:$0xff]
      %v551 = vld [vmem:[#allocation13 + $0x170] sm:$0xff]
      %v552 = vld [vmem:[#allocation13 + $0x178] sm:$0xff]
      %v553 = vld [vmem:[#allocation13 + $0x180] sm:$0xff]
      %v554 = vld [vmem:[#allocation13 + $0x188] sm:$0xff]
      %v555 = vld [vmem:[#allocation13 + $0x190] sm:$0xff]
      %v556 = vld [vmem:[#allocation13 + $0x198] sm:$0xff]
      %v557 = vld [vmem:[#allocation13 + $0x1a0] sm:$0xff]
      %v558 = vld [vmem:[#allocation13 + $0x1a8] sm:$0xff]
      %v559 = vld [vmem:[#allocation13 + $0x1b0] sm:$0xff]
      %v560 = vld [vmem:[#allocation13 + $0x1b8] sm:$0xff]
      %v561 = vld [vmem:[#allocation13 + $0x1c0] sm:$0xff]
      %v562 = vld [vmem:[#allocation13 + $0x1c8] sm:$0xff]
      %v563 = vld [vmem:[#allocation13 + $0x1d0] sm:$0xff]
      %v564 = vld [vmem:[#allocation13 + $0x1d8] sm:$0xff]
      %v565 = vld [vmem:[#allocation13 + $0x1e0] sm:$0xff]
      %v566 = vld [vmem:[#allocation13 + $0x1e8] sm:$0xff]
      %v567 = vld [vmem:[#allocation13 + $0x1f0] sm:$0xff]
      %v568 = vld [vmem:[#allocation13 + $0x1f8] sm:$0xff]
      %569 = vmatprep.subr.mxu0 %v506
      %570 = vmatpush1.msra.mxu0 %v505
      %571 = vmatprep.subr.mxu0 %v510
      %572 = vmatpush1.msra.mxu0 %v509
      %573 = vmatprep.subr.mxu0 %v514
      %574 = vmatpush1.msra.mxu0 %v513
      %575 = vmatprep.subr.mxu0 %v518
      %576 = vmatpush1.msra.mxu0 %v517
      %577 = vmatprep.subr.mxu0 %v522
      %578 = vmatpush1.msra.mxu0 %v521
      %579 = vmatprep.subr.mxu0 %v526
      %580 = vmatpush1.msra.mxu0 %v525
      %581 = vmatprep.subr.mxu0 %v530
      %582 = vmatpush1.msra.mxu0 %v529
      %583 = vmatprep.subr.mxu0 %v534
      %584 = vmatpush1.msra.mxu0 %v533
      %585 = vmatprep.subr.mxu0 %v538
      %586 = vmatpush1.msra.mxu0 %v537
      %587 = vmatprep.subr.mxu0 %v542
      %588 = vmatpush1.msra.mxu0 %v541
      %589 = vmatprep.subr.mxu0 %v546
      %590 = vmatpush1.msra.mxu0 %v545
      %591 = vmatprep.subr.mxu0 %v550
      %592 = vmatpush1.msra.mxu0 %v549
      %593 = vmatprep.subr.mxu0 %v554
      %594 = vmatpush1.msra.mxu0 %v553
      %595 = vmatprep.subr.mxu0 %v558
      %596 = vmatpush1.msra.mxu0 %v557
      %597 = vmatprep.subr.mxu0 %v562
      %598 = vmatpush1.msra.mxu0 %v561
      %599 = vmatprep.subr.mxu0 %v566
      %600 = vmatpush1.msra.mxu0 %v565
      %601 = vmatprep.subr.mxu0 0.0
      %602 = vmatpush1.msra.mxu0 0.0
      %603 = vmatprep.subr.mxu0 0.0
      %604 = vmatpush1.msra.mxu0 0.0
      %605 = vmatprep.subr.mxu0 0.0
      %606 = vmatpush1.msra.mxu0 0.0
      %607 = vmatprep.subr.mxu0 0.0
      %608 = vmatpush1.msra.mxu0 0.0
      %609 = vmatprep.subr.mxu0 0.0
      %610 = vmatpush1.msra.mxu0 0.0
      %611 = vmatprep.subr.mxu0 0.0
      %612 = vmatpush1.msra.mxu0 0.0
      %613 = vmatprep.subr.mxu0 0.0
      %614 = vmatpush1.msra.mxu0 0.0
      %615 = vmatprep.subr.mxu0 0.0
      %616 = vmatpush1.msra.mxu0 0.0
      %617 = vmatprep.subr.mxu0 0.0
      %618 = vmatpush1.msra.mxu0 0.0
      %619 = vmatprep.subr.mxu0 0.0
      %620 = vmatpush1.msra.mxu0 0.0
      %621 = vmatprep.subr.mxu0 0.0
      %622 = vmatpush1.msra.mxu0 0.0
      %623 = vmatprep.subr.mxu0 0.0
      %624 = vmatpush1.msra.mxu0 0.0
      %625 = vmatprep.subr.mxu0 0.0
      %626 = vmatpush1.msra.mxu0 0.0
      %627 = vmatprep.subr.mxu0 0.0
      %628 = vmatpush1.msra.mxu0 0.0
      %629 = vmatprep.subr.mxu0 0.0
      %630 = vmatpush1.msra.mxu0 0.0
      %631 = vmatprep.subr.mxu0 0.0
      %632 = vmatpush1.msra.mxu0 0.0
      %633 = vmatprep.mubr.f32.mxu0 0.0
      %634 = vmatmul.mubr.f32.gmra.mrb[0].mxu0 %v493
      %v635 = vpop.f32.mrb[0].mxu0
      %v636 = vadd.f32 0.0, %v635
      %v637 = vpop.f32.mrb[0].mxu0
      %v638 = vadd.f32 0.0, %v637
      %639 = vdwg.mxu0
      %640 = vmatprep.subr.mxu0 %v508
      %641 = vmatpush1.msra.mxu0 %v507
      %642 = vmatprep.subr.mxu0 %v512
      %643 = vmatpush1.msra.mxu0 %v511
      %644 = vmatprep.subr.mxu0 %v516
      %645 = vmatpush1.msra.mxu0 %v515
      %646 = vmatprep.subr.mxu0 %v520
      %647 = vmatpush1.msra.mxu0 %v519
      %648 = vmatprep.subr.mxu0 %v524
      %649 = vmatpush1.msra.mxu0 %v523
      %650 = vmatprep.subr.mxu0 %v528
      %651 = vmatpush1.msra.mxu0 %v527
      %652 = vmatprep.subr.mxu0 %v532
      %653 = vmatpush1.msra.mxu0 %v531
      %654 = vmatprep.subr.mxu0 %v536
      %655 = vmatpush1.msra.mxu0 %v535
      %656 = vmatprep.subr.mxu0 %v540
      %657 = vmatpush1.msra.mxu0 %v539
      %658 = vmatprep.subr.mxu0 %v544
      %659 = vmatpush1.msra.mxu0 %v543
      %660 = vmatprep.subr.mxu0 %v548
      %661 = vmatpush1.msra.mxu0 %v547
      %662 = vmatprep.subr.mxu0 %v552
      %663 = vmatpush1.msra.mxu0 %v551
      %664 = vmatprep.subr.mxu0 %v556
      %665 = vmatpush1.msra.mxu0 %v555
      %666 = vmatprep.subr.mxu0 %v560
      %667 = vmatpush1.msra.mxu0 %v559
      %668 = vmatprep.subr.mxu0 %v564
      %669 = vmatpush1.msra.mxu0 %v563
      %670 = vmatprep.subr.mxu0 %v568
      %671 = vmatpush1.msra.mxu0 %v567
      %672 = vmatprep.subr.mxu0 0.0
      %673 = vmatpush1.msra.mxu0 0.0
      %674 = vmatprep.subr.mxu0 0.0
      %675 = vmatpush1.msra.mxu0 0.0
      %676 = vmatprep.subr.mxu0 0.0
      %677 = vmatpush1.msra.mxu0 0.0
      %678 = vmatprep.subr.mxu0 0.0
      %679 = vmatpush1.msra.mxu0 0.0
      %680 = vmatprep.subr.mxu0 0.0
      %681 = vmatpush1.msra.mxu0 0.0
      %682 = vmatprep.subr.mxu0 0.0
      %683 = vmatpush1.msra.mxu0 0.0
      %684 = vmatprep.subr.mxu0 0.0
      %685 = vmatpush1.msra.mxu0 0.0
      %686 = vmatprep.subr.mxu0 0.0
      %687 = vmatpush1.msra.mxu0 0.0
      %688 = vmatprep.subr.mxu0 0.0
      %689 = vmatpush1.msra.mxu0 0.0
      %690 = vmatprep.subr.mxu0 0.0
      %691 = vmatpush1.msra.mxu0 0.0
      %692 = vmatprep.subr.mxu0 0.0
      %693 = vmatpush1.msra.mxu0 0.0
      %694 = vmatprep.subr.mxu0 0.0
      %695 = vmatpush1.msra.mxu0 0.0
      %696 = vmatprep.subr.mxu0 0.0
      %697 = vmatpush1.msra.mxu0 0.0
      %698 = vmatprep.subr.mxu0 0.0
      %699 = vmatpush1.msra.mxu0 0.0
      %700 = vmatprep.subr.mxu0 0.0
      %701 = vmatpush1.msra.mxu0 0.0
      %702 = vmatprep.subr.mxu0 0.0
      %703 = vmatpush1.msra.mxu0 0.0
      %704 = vmatprep.mubr.f32.mxu0 0.0
      %705 = vmatmul.mubr.f32.gmra.mrb[0].mxu0 %v493
      %v706 = vpop.f32.mrb[0].mxu0
      %v707 = vadd.f32 0.0, %v706
      %v708 = vpop.f32.mrb[0].mxu0
      %v709 = vadd.f32 0.0, %v708
      %710 = vdwg.mxu0
      %v711 = vadd.f32 %v501, %v636
      %v712 = vadd.f32 %v502, %v638
      %v713 = vadd.f32 %v503, %v707
      %v714 = vadd.f32 %v504, %v709
      %v715 = vxor.u32 %v711, 2147483648
      %v716 = vmul.f32 %v715, 1.442695
      %v717 = vpow.pop %v716
      %v718 = vadd.f32 %v717, 1.0
      %v719 = vrcp.pop %v718
      %v720 = vmul.f32 1.0, %v719
      %v721 = vxor.u32 %v712, 2147483648
      %v722 = vmul.f32 %v721, 1.442695
      %v723 = vpow.pop %v722
      %v724 = vadd.f32 %v723, 1.0
      %v725 = vrcp.pop %v724
      %v726 = vmul.f32 1.0, %v725
      %v727 = vtanh.pop %v713
      %v728 = vxor.u32 %v714, 2147483648
      %v729 = vmul.f32 %v728, 1.442695
      %v730 = vpow.pop %v729
      %v731 = vadd.f32 %v730, 1.0
      %v732 = vrcp.pop %v731
      %v733 = vmul.f32 1.0, %v732
      %v734 = vmul.f32 %v726, %v494
      %v735 = vmul.f32 %v720, %v727
      %v736 = vadd.f32 %v734, %v735
      %v737 = vtanh.pop %v736
      %v738 = vmul.f32 %v733, %v737
      %s739 = scalar_lea.vmem [#allocation3], %s495
      %740 = vst [vmem:[%s739] sm:$0xff] %v738
    $region74: #{tpu_custom_call.1} parent=1 // loop_footer
      %s492 = sadd.s32 1, %s488
    $region75: #{tpu_custom_call.1} parent=1 // loop_footer_branch
      %487 = sbr.rel target = $region71
    $region76: #{tpu_custom_call.1} parent=1 // loop_exit
      _
    %741 = vst [vmem:[#allocation16] sm:$0xff] %v493
    %742 = vst [vmem:[#allocation17] sm:$0xff] %v494
    %v743 = vld [vmem:[#allocation3] sm:$0xff]
    %v744 = vld [vmem:[#allocation3 + $0x8] sm:$0xff]
    %v745 = vld [vmem:[#allocation3 + $0x10] sm:$0xff]
    %v746 = vld [vmem:[#allocation3 + $0x18] sm:$0xff]
    %v747 = vld [vmem:[#allocation3 + $0x20] sm:$0xff]
    %v748 = vld [vmem:[#allocation3 + $0x28] sm:$0xff]
    %v749 = vld [vmem:[#allocation3 + $0x30] sm:$0xff]
    %v750 = vld [vmem:[#allocation3 + $0x38] sm:$0xff]
    %s751 = scalar_lea.vmem [#allocation10], 512
    %v752 = vld [vmem:[%s751] sm:$0xff]
    %v753 = vld [vmem:[%s751 + $0x8] sm:$0xff]
    %v754 = vld [vmem:[%s751 + $0x10] sm:$0xff]
    %v755 = vld [vmem:[%s751 + $0x18] sm:$0xff]
    %v756 = vld [vmem:[%s751 + $0x20] sm:$0xff]
    %v757 = vld [vmem:[%s751 + $0x28] sm:$0xff]
    %v758 = vld [vmem:[%s751 + $0x30] sm:$0xff]
    %v759 = vld [vmem:[%s751 + $0x38] sm:$0xff]
    %v760 = vld [vmem:[%s751 + $0x40] sm:$0xff]
    %v761 = vld [vmem:[%s751 + $0x48] sm:$0xff]
    %v762 = vld [vmem:[%s751 + $0x50] sm:$0xff]
    %v763 = vld [vmem:[%s751 + $0x58] sm:$0xff]
    %v764 = vld [vmem:[%s751 + $0x60] sm:$0xff]
    %v765 = vld [vmem:[%s751 + $0x68] sm:$0xff]
    %v766 = vld [vmem:[%s751 + $0x70] sm:$0xff]
    %v767 = vld [vmem:[%s751 + $0x78] sm:$0xff]
    %v768 = vld [vmem:[%s751 + $0x80] sm:$0xff]
    %v769 = vld [vmem:[%s751 + $0x88] sm:$0xff]
    %v770 = vld [vmem:[%s751 + $0x90] sm:$0xff]
    %v771 = vld [vmem:[%s751 + $0x98] sm:$0xff]
    %v772 = vld [vmem:[%s751 + $0xa0] sm:$0xff]
    %v773 = vld [vmem:[%s751 + $0xa8] sm:$0xff]
    %v774 = vld [vmem:[%s751 + $0xb0] sm:$0xff]
    %v775 = vld [vmem:[%s751 + $0xb8] sm:$0xff]
    %v776 = vld [vmem:[%s751 + $0xc0] sm:$0xff]
    %v777 = vld [vmem:[%s751 + $0xc8] sm:$0xff]
    %v778 = vld [vmem:[%s751 + $0xd0] sm:$0xff]
    %v779 = vld [vmem:[%s751 + $0xd8] sm:$0xff]
    %v780 = vld [vmem:[%s751 + $0xe0] sm:$0xff]
    %v781 = vld [vmem:[%s751 + $0xe8] sm:$0xff]
    %v782 = vld [vmem:[%s751 + $0xf0] sm:$0xff]
    %v783 = vld [vmem:[%s751 + $0xf8] sm:$0xff]
    %v784 = vld [vmem:[%s751 + $0x100] sm:$0xff]
    %v785 = vld [vmem:[%s751 + $0x108] sm:$0xff]
    %v786 = vld [vmem:[%s751 + $0x110] sm:$0xff]
    %v787 = vld [vmem:[%s751 + $0x118] sm:$0xff]
    %v788 = vld [vmem:[%s751 + $0x120] sm:$0xff]
    %v789 = vld [vmem:[%s751 + $0x128] sm:$0xff]
    %v790 = vld [vmem:[%s751 + $0x130] sm:$0xff]
    %v791 = vld [vmem:[%s751 + $0x138] sm:$0xff]
    %v792 = vld [vmem:[%s751 + $0x140] sm:$0xff]
    %v793 = vld [vmem:[%s751 + $0x148] sm:$0xff]
    %v794 = vld [vmem:[%s751 + $0x150] sm:$0xff]
    %v795 = vld [vmem:[%s751 + $0x158] sm:$0xff]
    %v796 = vld [vmem:[%s751 + $0x160] sm:$0xff]
    %v797 = vld [vmem:[%s751 + $0x168] sm:$0xff]
    %v798 = vld [vmem:[%s751 + $0x170] sm:$0xff]
    %v799 = vld [vmem:[%s751 + $0x178] sm:$0xff]
    %v800 = vld [vmem:[%s751 + $0x180] sm:$0xff]
    %v801 = vld [vmem:[%s751 + $0x188] sm:$0xff]
    %v802 = vld [vmem:[%s751 + $0x190] sm:$0xff]
    %v803 = vld [vmem:[%s751 + $0x198] sm:$0xff]
    %v804 = vld [vmem:[%s751 + $0x1a0] sm:$0xff]
    %v805 = vld [vmem:[%s751 + $0x1a8] sm:$0xff]
    %v806 = vld [vmem:[%s751 + $0x1b0] sm:$0xff]
    %v807 = vld [vmem:[%s751 + $0x1b8] sm:$0xff]
    %v808 = vld [vmem:[%s751 + $0x1c0] sm:$0xff]
    %v809 = vld [vmem:[%s751 + $0x1c8] sm:$0xff]
    %v810 = vld [vmem:[%s751 + $0x1d0] sm:$0xff]
    %v811 = vld [vmem:[%s751 + $0x1d8] sm:$0xff]
    %v812 = vld [vmem:[%s751 + $0x1e0] sm:$0xff]
    %v813 = vld [vmem:[%s751 + $0x1e8] sm:$0xff]
    %v814 = vld [vmem:[%s751 + $0x1f0] sm:$0xff]
    %v815 = vld [vmem:[%s751 + $0x1f8] sm:$0xff]
    %s816 = scalar_lea.vmem [#allocation12], 4
    %v817 = vld [vmem:[%s816] sm:$0xf]
    %v819 = vlaneseq
    %v820 = vshrl.u32 %v819, 7
    %v821 = vsub.s32 0, %v820
    %v822 = vrot.slane %v817, %v821
    %v823 = vlaneseq
    %v824 = vshrl.u32 %v823, 7
    %v825 = vsub.s32 1, %v824
    %v826 = vrot.slane %v817, %v825
    %v827 = vlaneseq
    %v828 = vshrl.u32 %v827, 7
    %v829 = vsub.s32 2, %v828
    %v830 = vrot.slane %v817, %v829
    %v831 = vlaneseq
    %v832 = vshrl.u32 %v831, 7
    %v833 = vsub.s32 3, %v832
    %v834 = vrot.slane %v817, %v833
    %839 = vmatprep.subr.mxu0 %v753
    %840 = vmatpush1.msra.mxu0 %v752
    %841 = vmatprep.subr.mxu0 %v757
    %842 = vmatpush1.msra.mxu0 %v756
    %843 = vmatprep.subr.mxu0 %v761
    %844 = vmatpush1.msra.mxu0 %v760
    %845 = vmatprep.subr.mxu0 %v765
    %846 = vmatpush1.msra.mxu0 %v764
    %847 = vmatprep.subr.mxu0 %v769
    %848 = vmatpush1.msra.mxu0 %v768
    %849 = vmatprep.subr.mxu0 %v773
    %850 = vmatpush1.msra.mxu0 %v772
    %851 = vmatprep.subr.mxu0 %v777
    %852 = vmatpush1.msra.mxu0 %v776
    %853 = vmatprep.subr.mxu0 %v781
    %854 = vmatpush1.msra.mxu0 %v780
    %855 = vmatprep.subr.mxu0 %v785
    %856 = vmatpush1.msra.mxu0 %v784
    %857 = vmatprep.subr.mxu0 %v789
    %858 = vmatpush1.msra.mxu0 %v788
    %859 = vmatprep.subr.mxu0 %v793
    %860 = vmatpush1.msra.mxu0 %v792
    %861 = vmatprep.subr.mxu0 %v797
    %862 = vmatpush1.msra.mxu0 %v796
    %863 = vmatprep.subr.mxu0 %v801
    %864 = vmatpush1.msra.mxu0 %v800
    %865 = vmatprep.subr.mxu0 %v805
    %866 = vmatpush1.msra.mxu0 %v804
    %867 = vmatprep.subr.mxu0 %v809
    %868 = vmatpush1.msra.mxu0 %v808
    %869 = vmatprep.subr.mxu0 %v813
    %870 = vmatpush1.msra.mxu0 %v812
    %871 = vmatprep.subr.mxu0 0.0
    %872 = vmatpush1.msra.mxu0 0.0
    %873 = vmatprep.subr.mxu0 0.0
    %874 = vmatpush1.msra.mxu0 0.0
    %875 = vmatprep.subr.mxu0 0.0
    %876 = vmatpush1.msra.mxu0 0.0
    %877 = vmatprep.subr.mxu0 0.0
    %878 = vmatpush1.msra.mxu0 0.0
    %879 = vmatprep.subr.mxu0 0.0
    %880 = vmatpush1.msra.mxu0 0.0
    %881 = vmatprep.subr.mxu0 0.0
    %882 = vmatpush1.msra.mxu0 0.0
    %883 = vmatprep.subr.mxu0 0.0
    %884 = vmatpush1.msra.mxu0 0.0
    %885 = vmatprep.subr.mxu0 0.0
    %886 = vmatpush1.msra.mxu0 0.0
    %887 = vmatprep.subr.mxu0 0.0
    %888 = vmatpush1.msra.mxu0 0.0
    %889 = vmatprep.subr.mxu0 0.0
    %890 = vmatpush1.msra.mxu0 0.0
    %891 = vmatprep.subr.mxu0 0.0
    %892 = vmatpush1.msra.mxu0 0.0
    %893 = vmatprep.subr.mxu0 0.0
    %894 = vmatpush1.msra.mxu0 0.0
    %895 = vmatprep.subr.mxu0 0.0
    %896 = vmatpush1.msra.mxu0 0.0
    %897 = vmatprep.subr.mxu0 0.0
    %898 = vmatpush1.msra.mxu0 0.0
    %899 = vmatprep.subr.mxu0 0.0
    %900 = vmatpush1.msra.mxu0 0.0
    %901 = vmatprep.subr.mxu0 0.0
    %902 = vmatpush1.msra.mxu0 0.0
    %903 = vmatprep.mubr.f32.mxu0 0.0
    %904 = vmatmul.mubr.f32.gmra.mrb[0].mxu0 %v743
    %v905 = vpop.f32.mrb[0].mxu0
    %v906 = vadd.f32 %v822, %v905
    %v907 = vpop.f32.mrb[0].mxu0
    %v908 = vadd.f32 %v826, %v907
    %909 = vmatprep.mubr.f32.mxu0 0.0
    %910 = vmatmul.mubr.f32.gmra.mrb[0].mxu0 %v744
    %v911 = vpop.f32.mrb[0].mxu0
    %v912 = vadd.f32 %v822, %v911
    %v913 = vpop.f32.mrb[0].mxu0
    %v914 = vadd.f32 %v826, %v913
    %915 = vmatprep.mubr.f32.mxu0 0.0
    %916 = vmatmul.mubr.f32.gmra.mrb[0].mxu0 %v745
    %v917 = vpop.f32.mrb[0].mxu0
    %v918 = vadd.f32 %v822, %v917
    %v919 = vpop.f32.mrb[0].mxu0
    %v920 = vadd.f32 %v826, %v919
    %921 = vmatprep.mubr.f32.mxu0 0.0
    %922 = vmatmul.mubr.f32.gmra.mrb[0].mxu0 %v746
    %v923 = vpop.f32.mrb[0].mxu0
    %v924 = vadd.f32 %v822, %v923
    %v925 = vpop.f32.mrb[0].mxu0
    %v926 = vadd.f32 %v826, %v925
    %927 = vmatprep.mubr.f32.mxu0 0.0
    %928 = vmatmul.mubr.f32.gmra.mrb[0].mxu0 %v747
    %v929 = vpop.f32.mrb[0].mxu0
    %v930 = vadd.f32 %v822, %v929
    %v931 = vpop.f32.mrb[0].mxu0
    %v932 = vadd.f32 %v826, %v931
    %933 = vmatprep.mubr.f32.mxu0 0.0
    %934 = vmatmul.mubr.f32.gmra.mrb[0].mxu0 %v748
    %v935 = vpop.f32.mrb[0].mxu0
    %v936 = vadd.f32 %v822, %v935
    %v937 = vpop.f32.mrb[0].mxu0
    %v938 = vadd.f32 %v826, %v937
    %939 = vmatprep.mubr.f32.mxu0 0.0
    %940 = vmatmul.mubr.f32.gmra.mrb[0].mxu0 %v749
    %v941 = vpop.f32.mrb[0].mxu0
    %v942 = vadd.f32 %v822, %v941
    %v943 = vpop.f32.mrb[0].mxu0
    %v944 = vadd.f32 %v826, %v943
    %945 = vmatprep.mubr.f32.mxu0 0.0
    %946 = vmatmul.mubr.f32.gmra.mrb[0].mxu0 %v750
    %v947 = vpop.f32.mrb[0].mxu0
    %v948 = vadd.f32 %v822, %v947
    %v949 = vpop.f32.mrb[0].mxu0
    %v950 = vadd.f32 %v826, %v949
    %951 = vdwg.mxu0
    %952 = vmatprep.subr.mxu0 %v755
    %953 = vmatpush1.msra.mxu0 %v754
    %954 = vmatprep.subr.mxu0 %v759
    %955 = vmatpush1.msra.mxu0 %v758
    %956 = vmatprep.subr.mxu0 %v763
    %957 = vmatpush1.msra.mxu0 %v762
    %958 = vmatprep.subr.mxu0 %v767
    %959 = vmatpush1.msra.mxu0 %v766
    %960 = vmatprep.subr.mxu0 %v771
    %961 = vmatpush1.msra.mxu0 %v770
    %962 = vmatprep.subr.mxu0 %v775
    %963 = vmatpush1.msra.mxu0 %v774
    %964 = vmatprep.subr.mxu0 %v779
    %965 = vmatpush1.msra.mxu0 %v778
    %966 = vmatprep.subr.mxu0 %v783
    %967 = vmatpush1.msra.mxu0 %v782
    %968 = vmatprep.subr.mxu0 %v787
    %969 = vmatpush1.msra.mxu0 %v786
    %970 = vmatprep.subr.mxu0 %v791
    %971 = vmatpush1.msra.mxu0 %v790
    %972 = vmatprep.subr.mxu0 %v795
    %973 = vmatpush1.msra.mxu0 %v794
    %974 = vmatprep.subr.mxu0 %v799
    %975 = vmatpush1.msra.mxu0 %v798
    %976 = vmatprep.subr.mxu0 %v803
    %977 = vmatpush1.msra.mxu0 %v802
    %978 = vmatprep.subr.mxu0 %v807
    %979 = vmatpush1.msra.mxu0 %v806
    %980 = vmatprep.subr.mxu0 %v811
    %981 = vmatpush1.msra.mxu0 %v810
    %982 = vmatprep.subr.mxu0 %v815
    %983 = vmatpush1.msra.mxu0 %v814
    %984 = vmatprep.subr.mxu0 0.0
    %985 = vmatpush1.msra.mxu0 0.0
    %986 = vmatprep.subr.mxu0 0.0
    %987 = vmatpush1.msra.mxu0 0.0
    %988 = vmatprep.subr.mxu0 0.0
    %989 = vmatpush1.msra.mxu0 0.0
    %990 = vmatprep.subr.mxu0 0.0
    %991 = vmatpush1.msra.mxu0 0.0
    %992 = vmatprep.subr.mxu0 0.0
    %993 = vmatpush1.msra.mxu0 0.0
    %994 = vmatprep.subr.mxu0 0.0
    %995 = vmatpush1.msra.mxu0 0.0
    %996 = vmatprep.subr.mxu0 0.0
    %997 = vmatpush1.msra.mxu0 0.0
    %998 = vmatprep.subr.mxu0 0.0
    %999 = vmatpush1.msra.mxu0 0.0
    %1000 = vmatprep.subr.mxu0 0.0
    %1001 = vmatpush1.msra.mxu0 0.0
    %1002 = vmatprep.subr.mxu0 0.0
    %1003 = vmatpush1.msra.mxu0 0.0
    %1004 = vmatprep.subr.mxu0 0.0
    %1005 = vmatpush1.msra.mxu0 0.0
    %1006 = vmatprep.subr.mxu0 0.0
    %1007 = vmatpush1.msra.mxu0 0.0
    %1008 = vmatprep.subr.mxu0 0.0
    %1009 = vmatpush1.msra.mxu0 0.0
    %1010 = vmatprep.subr.mxu0 0.0
    %1011 = vmatpush1.msra.mxu0 0.0
    %1012 = vmatprep.subr.mxu0 0.0
    %1013 = vmatpush1.msra.mxu0 0.0
    %1014 = vmatprep.subr.mxu0 0.0
    %1015 = vmatpush1.msra.mxu0 0.0
    %1016 = vmatprep.mubr.f32.mxu0 0.0
    %1017 = vmatmul.mubr.f32.gmra.mrb[0].mxu0 %v743
    %v1018 = vpop.f32.mrb[0].mxu0
    %v1019 = vadd.f32 %v830, %v1018
    %v1020 = vpop.f32.mrb[0].mxu0
    %v1021 = vadd.f32 %v834, %v1020
    %1022 = vmatprep.mubr.f32.mxu0 0.0
    %1023 = vmatmul.mubr.f32.gmra.mrb[0].mxu0 %v744
    %v1024 = vpop.f32.mrb[0].mxu0
    %v1025 = vadd.f32 %v830, %v1024
    %v1026 = vpop.f32.mrb[0].mxu0
    %v1027 = vadd.f32 %v834, %v1026
    %1028 = vmatprep.mubr.f32.mxu0 0.0
    %1029 = vmatmul.mubr.f32.gmra.mrb[0].mxu0 %v745
    %v1030 = vpop.f32.mrb[0].mxu0
    %v1031 = vadd.f32 %v830, %v1030
    %v1032 = vpop.f32.mrb[0].mxu0
    %v1033 = vadd.f32 %v834, %v1032
    %1034 = vmatprep.mubr.f32.mxu0 0.0
    %1035 = vmatmul.mubr.f32.gmra.mrb[0].mxu0 %v746
    %v1036 = vpop.f32.mrb[0].mxu0
    %v1037 = vadd.f32 %v830, %v1036
    %v1038 = vpop.f32.mrb[0].mxu0
    %v1039 = vadd.f32 %v834, %v1038
    %1040 = vmatprep.mubr.f32.mxu0 0.0
    %1041 = vmatmul.mubr.f32.gmra.mrb[0].mxu0 %v747
    %v1042 = vpop.f32.mrb[0].mxu0
    %v1043 = vadd.f32 %v830, %v1042
    %v1044 = vpop.f32.mrb[0].mxu0
    %v1045 = vadd.f32 %v834, %v1044
    %1046 = vmatprep.mubr.f32.mxu0 0.0
    %1047 = vmatmul.mubr.f32.gmra.mrb[0].mxu0 %v748
    %v1048 = vpop.f32.mrb[0].mxu0
    %v1049 = vadd.f32 %v830, %v1048
    %v1050 = vpop.f32.mrb[0].mxu0
    %v1051 = vadd.f32 %v834, %v1050
    %1052 = vmatprep.mubr.f32.mxu0 0.0
    %1053 = vmatmul.mubr.f32.gmra.mrb[0].mxu0 %v749
    %v1054 = vpop.f32.mrb[0].mxu0
    %v1055 = vadd.f32 %v830, %v1054
    %v1056 = vpop.f32.mrb[0].mxu0
    %v1057 = vadd.f32 %v834, %v1056
    %1058 = vmatprep.mubr.f32.mxu0 0.0
    %1059 = vmatmul.mubr.f32.gmra.mrb[0].mxu0 %v750
    %v1060 = vpop.f32.mrb[0].mxu0
    %v1061 = vadd.f32 %v830, %v1060
    %v1062 = vpop.f32.mrb[0].mxu0
    %v1063 = vadd.f32 %v834, %v1062
    %1064 = vdwg.mxu0
    %1065 = vst [vmem:[#allocation2] sm:$0xff] %v906
    %1066 = vst [vmem:[#allocation2 + $0x8] sm:$0xff] %v908
    %1067 = vst [vmem:[#allocation2 + $0x10] sm:$0xff] %v1019
    %1068 = vst [vmem:[#allocation2 + $0x18] sm:$0xff] %v1021
    %1069 = vst [vmem:[#allocation2 + $0x20] sm:$0xff] %v912
    %1070 = vst [vmem:[#allocation2 + $0x28] sm:$0xff] %v914
    %1071 = vst [vmem:[#allocation2 + $0x30] sm:$0xff] %v1025
    %1072 = vst [vmem:[#allocation2 + $0x38] sm:$0xff] %v1027
    %1073 = vst [vmem:[#allocation2 + $0x40] sm:$0xff] %v918
    %1074 = vst [vmem:[#allocation2 + $0x48] sm:$0xff] %v920
    %1075 = vst [vmem:[#allocation2 + $0x50] sm:$0xff] %v1031
    %1076 = vst [vmem:[#allocation2 + $0x58] sm:$0xff] %v1033
    %1077 = vst [vmem:[#allocation2 + $0x60] sm:$0xff] %v924
    %1078 = vst [vmem:[#allocation2 + $0x68] sm:$0xff] %v926
    %1079 = vst [vmem:[#allocation2 + $0x70] sm:$0xff] %v1037
    %1080 = vst [vmem:[#allocation2 + $0x78] sm:$0xff] %v1039
    %1081 = vst [vmem:[#allocation2 + $0x80] sm:$0xff] %v930
    %1082 = vst [vmem:[#allocation2 + $0x88] sm:$0xff] %v932
    %1083 = vst [vmem:[#allocation2 + $0x90] sm:$0xff] %v1043
    %1084 = vst [vmem:[#allocation2 + $0x98] sm:$0xff] %v1045
    %1085 = vst [vmem:[#allocation2 + $0xa0] sm:$0xff] %v936
    %1086 = vst [vmem:[#allocation2 + $0xa8] sm:$0xff] %v938
    %1087 = vst [vmem:[#allocation2 + $0xb0] sm:$0xff] %v1049
    %1088 = vst [vmem:[#allocation2 + $0xb8] sm:$0xff] %v1051
    %1089 = vst [vmem:[#allocation2 + $0xc0] sm:$0xff] %v942
    %1090 = vst [vmem:[#allocation2 + $0xc8] sm:$0xff] %v944
    %1091 = vst [vmem:[#allocation2 + $0xd0] sm:$0xff] %v1055
    %1092 = vst [vmem:[#allocation2 + $0xd8] sm:$0xff] %v1057
    %1093 = vst [vmem:[#allocation2 + $0xe0] sm:$0xff] %v948
    %1094 = vst [vmem:[#allocation2 + $0xe8] sm:$0xff] %v950
    %1095 = vst [vmem:[#allocation2 + $0xf0] sm:$0xff] %v1061
    %1096 = vst [vmem:[#allocation2 + $0xf8] sm:$0xff] %v1063
    %s1097 = scalar_lea.vmem %s8, 8
    %v1098 = vld [vmem:[%s1097] sm:$0xff]
    %s1099 = scalar_lea.vmem %s9, 8
    %v1100 = vld [vmem:[%s1099] sm:$0xff]
    loop: start=0, step=1, limit=8
    $region77: #{tpu_custom_call.1} parent=1 // loop_pre_header
      _
    $region78: #{tpu_custom_call.1} parent=1 // loop_header
      %s1102 = sphi 0, %s1106
      %p1103 = scmp.ge.s32.totalorder %s1102, 8
      %v1107 = vphi %v1098, %v1353
      %v1108 = vphi %v1100, %v1351
    $region79: #{tpu_custom_call.1} parent=1 // loop_header_branch
      %1105 = sbr.rel (%p1103) target = $region83
    $region80: #{tpu_custom_call.1} parent=1 // loop_body
      %s1109 = smul.u32 %s1102, 8
      %s1110 = sshra.s32 %s1109, 3
      %s1111 = sand.u32 %s1109, 7
      %s1112 = smul.u32 %s1110, 4
      %s1113 = smul.addr %s1112, 8
      %s1114 = scalar_lea.vmem [#allocation2], %s1113
      %v1115 = vld [vmem:[%s1114] sm:$0xff]
      %v1116 = vld [vmem:[%s1114 + $0x8] sm:$0xff]
      %v1117 = vld [vmem:[%s1114 + $0x10] sm:$0xff]
      %v1118 = vld [vmem:[%s1114 + $0x18] sm:$0xff]
      %s1119 = scalar_lea.vmem [#allocation13], 512
      %v1120 = vld [vmem:[%s1119] sm:$0xff]
      %v1121 = vld [vmem:[%s1119 + $0x8] sm:$0xff]
      %v1122 = vld [vmem:[%s1119 + $0x10] sm:$0xff]
      %v1123 = vld [vmem:[%s1119 + $0x18] sm:$0xff]
      %v1124 = vld [vmem:[%s1119 + $0x20] sm:$0xff]
      %v1125 = vld [vmem:[%s1119 + $0x28] sm:$0xff]
      %v1126 = vld [vmem:[%s1119 + $0x30] sm:$0xff]
      %v1127 = vld [vmem:[%s1119 + $0x38] sm:$0xff]
      %v1128 = vld [vmem:[%s1119 + $0x40] sm:$0xff]
      %v1129 = vld [vmem:[%s1119 + $0x48] sm:$0xff]
      %v1130 = vld [vmem:[%s1119 + $0x50] sm:$0xff]
      %v1131 = vld [vmem:[%s1119 + $0x58] sm:$0xff]
      %v1132 = vld [vmem:[%s1119 + $0x60] sm:$0xff]
      %v1133 = vld [vmem:[%s1119 + $0x68] sm:$0xff]
      %v1134 = vld [vmem:[%s1119 + $0x70] sm:$0xff]
      %v1135 = vld [vmem:[%s1119 + $0x78] sm:$0xff]
      %v1136 = vld [vmem:[%s1119 + $0x80] sm:$0xff]
      %v1137 = vld [vmem:[%s1119 + $0x88] sm:$0xff]
      %v1138 = vld [vmem:[%s1119 + $0x90] sm:$0xff]
      %v1139 = vld [vmem:[%s1119 + $0x98] sm:$0xff]
      %v1140 = vld [vmem:[%s1119 + $0xa0] sm:$0xff]
      %v1141 = vld [vmem:[%s1119 + $0xa8] sm:$0xff]
      %v1142 = vld [vmem:[%s1119 + $0xb0] sm:$0xff]
      %v1143 = vld [vmem:[%s1119 + $0xb8] sm:$0xff]
      %v1144 = vld [vmem:[%s1119 + $0xc0] sm:$0xff]
      %v1145 = vld [vmem:[%s1119 + $0xc8] sm:$0xff]
      %v1146 = vld [vmem:[%s1119 + $0xd0] sm:$0xff]
      %v1147 = vld [vmem:[%s1119 + $0xd8] sm:$0xff]
      %v1148 = vld [vmem:[%s1119 + $0xe0] sm:$0xff]
      %v1149 = vld [vmem:[%s1119 + $0xe8] sm:$0xff]
      %v1150 = vld [vmem:[%s1119 + $0xf0] sm:$0xff]
      %v1151 = vld [vmem:[%s1119 + $0xf8] sm:$0xff]
      %v1152 = vld [vmem:[%s1119 + $0x100] sm:$0xff]
      %v1153 = vld [vmem:[%s1119 + $0x108] sm:$0xff]
      %v1154 = vld [vmem:[%s1119 + $0x110] sm:$0xff]
      %v1155 = vld [vmem:[%s1119 + $0x118] sm:$0xff]
      %v1156 = vld [vmem:[%s1119 + $0x120] sm:$0xff]
      %v1157 = vld [vmem:[%s1119 + $0x128] sm:$0xff]
      %v1158 = vld [vmem:[%s1119 + $0x130] sm:$0xff]
      %v1159 = vld [vmem:[%s1119 + $0x138] sm:$0xff]
      %v1160 = vld [vmem:[%s1119 + $0x140] sm:$0xff]
      %v1161 = vld [vmem:[%s1119 + $0x148] sm:$0xff]
      %v1162 = vld [vmem:[%s1119 + $0x150] sm:$0xff]
      %v1163 = vld [vmem:[%s1119 + $0x158] sm:$0xff]
      %v1164 = vld [vmem:[%s1119 + $0x160] sm:$0xff]
      %v1165 = vld [vmem:[%s1119 + $0x168] sm:$0xff]
      %v1166 = vld [vmem:[%s1119 + $0x170] sm:$0xff]
      %v1167 = vld [vmem:[%s1119 + $0x178] sm:$0xff]
      %v1168 = vld [vmem:[%s1119 + $0x180] sm:$0xff]
      %v1169 = vld [vmem:[%s1119 + $0x188] sm:$0xff]
      %v1170 = vld [vmem:[%s1119 + $0x190] sm:$0xff]
      %v1171 = vld [vmem:[%s1119 + $0x198] sm:$0xff]
      %v1172 = vld [vmem:[%s1119 + $0x1a0] sm:$0xff]
      %v1173 = vld [vmem:[%s1119 + $0x1a8] sm:$0xff]
      %v1174 = vld [vmem:[%s1119 + $0x1b0] sm:$0xff]
      %v1175 = vld [vmem:[%s1119 + $0x1b8] sm:$0xff]
      %v1176 = vld [vmem:[%s1119 + $0x1c0] sm:$0xff]
      %v1177 = vld [vmem:[%s1119 + $0x1c8] sm:$0xff]
      %v1178 = vld [vmem:[%s1119 + $0x1d0] sm:$0xff]
      %v1179 = vld [vmem:[%s1119 + $0x1d8] sm:$0xff]
      %v1180 = vld [vmem:[%s1119 + $0x1e0] sm:$0xff]
      %v1181 = vld [vmem:[%s1119 + $0x1e8] sm:$0xff]
      %v1182 = vld [vmem:[%s1119 + $0x1f0] sm:$0xff]
      %v1183 = vld [vmem:[%s1119 + $0x1f8] sm:$0xff]
      %1184 = vmatprep.subr.mxu0 %v1121
      %1185 = vmatpush1.msra.mxu0 %v1120
      %1186 = vmatprep.subr.mxu0 %v1125
      %1187 = vmatpush1.msra.mxu0 %v1124
      %1188 = vmatprep.subr.mxu0 %v1129
      %1189 = vmatpush1.msra.mxu0 %v1128
      %1190 = vmatprep.subr.mxu0 %v1133
      %1191 = vmatpush1.msra.mxu0 %v1132
      %1192 = vmatprep.subr.mxu0 %v1137
      %1193 = vmatpush1.msra.mxu0 %v1136
      %1194 = vmatprep.subr.mxu0 %v1141
      %1195 = vmatpush1.msra.mxu0 %v1140
      %1196 = vmatprep.subr.mxu0 %v1145
      %1197 = vmatpush1.msra.mxu0 %v1144
      %1198 = vmatprep.subr.mxu0 %v1149
      %1199 = vmatpush1.msra.mxu0 %v1148
      %1200 = vmatprep.subr.mxu0 %v1153
      %1201 = vmatpush1.msra.mxu0 %v1152
      %1202 = vmatprep.subr.mxu0 %v1157
      %1203 = vmatpush1.msra.mxu0 %v1156
      %1204 = vmatprep.subr.mxu0 %v1161
      %1205 = vmatpush1.msra.mxu0 %v1160
      %1206 = vmatprep.subr.mxu0 %v1165
      %1207 = vmatpush1.msra.mxu0 %v1164
      %1208 = vmatprep.subr.mxu0 %v1169
      %1209 = vmatpush1.msra.mxu0 %v1168
      %1210 = vmatprep.subr.mxu0 %v1173
      %1211 = vmatpush1.msra.mxu0 %v1172
      %1212 = vmatprep.subr.mxu0 %v1177
      %1213 = vmatpush1.msra.mxu0 %v1176
      %1214 = vmatprep.subr.mxu0 %v1181
      %1215 = vmatpush1.msra.mxu0 %v1180
      %1216 = vmatprep.subr.mxu0 0.0
      %1217 = vmatpush1.msra.mxu0 0.0
      %1218 = vmatprep.subr.mxu0 0.0
      %1219 = vmatpush1.msra.mxu0 0.0
      %1220 = vmatprep.subr.mxu0 0.0
      %1221 = vmatpush1.msra.mxu0 0.0
      %1222 = vmatprep.subr.mxu0 0.0
      %1223 = vmatpush1.msra.mxu0 0.0
      %1224 = vmatprep.subr.mxu0 0.0
      %1225 = vmatpush1.msra.mxu0 0.0
      %1226 = vmatprep.subr.mxu0 0.0
      %1227 = vmatpush1.msra.mxu0 0.0
      %1228 = vmatprep.subr.mxu0 0.0
      %1229 = vmatpush1.msra.mxu0 0.0
      %1230 = vmatprep.subr.mxu0 0.0
      %1231 = vmatpush1.msra.mxu0 0.0
      %1232 = vmatprep.subr.mxu0 0.0
      %1233 = vmatpush1.msra.mxu0 0.0
      %1234 = vmatprep.subr.mxu0 0.0
      %1235 = vmatpush1.msra.mxu0 0.0
      %1236 = vmatprep.subr.mxu0 0.0
      %1237 = vmatpush1.msra.mxu0 0.0
      %1238 = vmatprep.subr.mxu0 0.0
      %1239 = vmatpush1.msra.mxu0 0.0
      %1240 = vmatprep.subr.mxu0 0.0
      %1241 = vmatpush1.msra.mxu0 0.0
      %1242 = vmatprep.subr.mxu0 0.0
      %1243 = vmatpush1.msra.mxu0 0.0
      %1244 = vmatprep.subr.mxu0 0.0
      %1245 = vmatpush1.msra.mxu0 0.0
      %1246 = vmatprep.subr.mxu0 0.0
      %1247 = vmatpush1.msra.mxu0 0.0
      %1248 = vmatprep.mubr.f32.mxu0 0.0
      %1249 = vmatmul.mubr.f32.gmra.mrb[0].mxu0 %v1107
      %v1250 = vpop.f32.mrb[0].mxu0
      %v1251 = vadd.f32 0.0, %v1250
      %v1252 = vpop.f32.mrb[0].mxu0
      %v1253 = vadd.f32 0.0, %v1252
      %1254 = vdwg.mxu0
      %1255 = vmatprep.subr.mxu0 %v1123
      %1256 = vmatpush1.msra.mxu0 %v1122
      %1257 = vmatprep.subr.mxu0 %v1127
      %1258 = vmatpush1.msra.mxu0 %v1126
      %1259 = vmatprep.subr.mxu0 %v1131
      %1260 = vmatpush1.msra.mxu0 %v1130
      %1261 = vmatprep.subr.mxu0 %v1135
      %1262 = vmatpush1.msra.mxu0 %v1134
      %1263 = vmatprep.subr.mxu0 %v1139
      %1264 = vmatpush1.msra.mxu0 %v1138
      %1265 = vmatprep.subr.mxu0 %v1143
      %1266 = vmatpush1.msra.mxu0 %v1142
      %1267 = vmatprep.subr.mxu0 %v1147
      %1268 = vmatpush1.msra.mxu0 %v1146
      %1269 = vmatprep.subr.mxu0 %v1151
      %1270 = vmatpush1.msra.mxu0 %v1150
      %1271 = vmatprep.subr.mxu0 %v1155
      %1272 = vmatpush1.msra.mxu0 %v1154
      %1273 = vmatprep.subr.mxu0 %v1159
      %1274 = vmatpush1.msra.mxu0 %v1158
      %1275 = vmatprep.subr.mxu0 %v1163
      %1276 = vmatpush1.msra.mxu0 %v1162
      %1277 = vmatprep.subr.mxu0 %v1167
      %1278 = vmatpush1.msra.mxu0 %v1166
      %1279 = vmatprep.subr.mxu0 %v1171
      %1280 = vmatpush1.msra.mxu0 %v1170
      %1281 = vmatprep.subr.mxu0 %v1175
      %1282 = vmatpush1.msra.mxu0 %v1174
      %1283 = vmatprep.subr.mxu0 %v1179
      %1284 = vmatpush1.msra.mxu0 %v1178
      %1285 = vmatprep.subr.mxu0 %v1183
      %1286 = vmatpush1.msra.mxu0 %v1182
      %1287 = vmatprep.subr.mxu0 0.0
      %1288 = vmatpush1.msra.mxu0 0.0
      %1289 = vmatprep.subr.mxu0 0.0
      %1290 = vmatpush1.msra.mxu0 0.0
      %1291 = vmatprep.subr.mxu0 0.0
      %1292 = vmatpush1.msra.mxu0 0.0
      %1293 = vmatprep.subr.mxu0 0.0
      %1294 = vmatpush1.msra.mxu0 0.0
      %1295 = vmatprep.subr.mxu0 0.0
      %1296 = vmatpush1.msra.mxu0 0.0
      %1297 = vmatprep.subr.mxu0 0.0
      %1298 = vmatpush1.msra.mxu0 0.0
      %1299 = vmatprep.subr.mxu0 0.0
      %1300 = vmatpush1.msra.mxu0 0.0
      %1301 = vmatprep.subr.mxu0 0.0
      %1302 = vmatpush1.msra.mxu0 0.0
      %1303 = vmatprep.subr.mxu0 0.0
      %1304 = vmatpush1.msra.mxu0 0.0
      %1305 = vmatprep.subr.mxu0 0.0
      %1306 = vmatpush1.msra.mxu0 0.0
      %1307 = vmatprep.subr.mxu0 0.0
      %1308 = vmatpush1.msra.mxu0 0.0
      %1309 = vmatprep.subr.mxu0 0.0
      %1310 = vmatpush1.msra.mxu0 0.0
      %1311 = vmatprep.subr.mxu0 0.0
      %1312 = vmatpush1.msra.mxu0 0.0
      %1313 = vmatprep.subr.mxu0 0.0
      %1314 = vmatpush1.msra.mxu0 0.0
      %1315 = vmatprep.subr.mxu0 0.0
      %1316 = vmatpush1.msra.mxu0 0.0
      %1317 = vmatprep.subr.mxu0 0.0
      %1318 = vmatpush1.msra.mxu0 0.0
      %1319 = vmatprep.mubr.f32.mxu0 0.0
      %1320 = vmatmul.mubr.f32.gmra.mrb[0].mxu0 %v1107
      %v1321 = vpop.f32.mrb[0].mxu0
      %v1322 = vadd.f32 0.0, %v1321
      %v1323 = vpop.f32.mrb[0].mxu0
      %v1324 = vadd.f32 0.0, %v1323
      %1325 = vdwg.mxu0
      %v1326 = vadd.f32 %v1115, %v1251
      %v1327 = vadd.f32 %v1116, %v1253
      %v1328 = vadd.f32 %v1117, %v1322
      %v1329 = vadd.f32 %v1118, %v1324
      %v1330 = vxor.u32 %v1326, 2147483648
      %v1331 = vmul.f32 %v1330, 1.442695
      %v1332 = vpow.pop %v1331
      %v1333 = vadd.f32 %v1332, 1.0
      %v1334 = vrcp.pop %v1333
      %v1335 = vmul.f32 1.0, %v1334
      %v1336 = vxor.u32 %v1327, 2147483648
      %v1337 = vmul.f32 %v1336, 1.442695
      %v1338 = vpow.pop %v1337
      %v1339 = vadd.f32 %v1338, 1.0
      %v1340 = vrcp.pop %v1339
      %v1341 = vmul.f32 1.0, %v1340
      %v1342 = vtanh.pop %v1328
      %v1343 = vxor.u32 %v1329, 2147483648
      %v1344 = vmul.f32 %v1343, 1.442695
      %v1345 = vpow.pop %v1344
      %v1346 = vadd.f32 %v1345, 1.0
      %v1347 = vrcp.pop %v1346
      %v1348 = vmul.f32 1.0, %v1347
      %v1349 = vmul.f32 %v1341, %v1108
      %v1350 = vmul.f32 %v1335, %v1342
      %v1351 = vadd.f32 %v1349, %v1350
      %v1352 = vtanh.pop %v1351
      %v1353 = vmul.f32 %v1348, %v1352
    $region81: #{tpu_custom_call.1} parent=1 // loop_footer
      %s1106 = sadd.s32 1, %s1102
    $region82: #{tpu_custom_call.1} parent=1 // loop_footer_branch
      %1101 = sbr.rel target = $region78
    $region83: #{tpu_custom_call.1} parent=1 // loop_exit
      _
    %s1354 = scalar_lea.vmem [#allocation16], 8
    %1355 = vst [vmem:[%s1354] sm:$0xff] %v1107
    %s1356 = scalar_lea.vmem [#allocation17], 8
    %1357 = vst [vmem:[%s1356] sm:$0xff] %v1108
    %v1358 = vld [vmem:[#allocation15] sm:$0xff]
    %v1359 = vld [vmem:[#allocation15 + $0x8] sm:$0xff]
    %v1360 = vld [vmem:[#allocation15 + $0x10] sm:$0xff]
    %v1361 = vld [vmem:[#allocation15 + $0x18] sm:$0xff]
    %v1362 = vld [vmem:[#allocation15 + $0x20] sm:$0xff]
    %v1363 = vld [vmem:[#allocation15 + $0x28] sm:$0xff]
    %v1364 = vld [vmem:[#allocation15 + $0x30] sm:$0xff]
    %v1365 = vld [vmem:[#allocation15 + $0x38] sm:$0xff]
    %v1366 = vld [vmem:[#allocation15 + $0x40] sm:$0xff]
    %v1367 = vld [vmem:[#allocation15 + $0x48] sm:$0xff]
    %v1368 = vld [vmem:[#allocation15 + $0x50] sm:$0xff]
    %v1369 = vld [vmem:[#allocation15 + $0x58] sm:$0xff]
    %v1370 = vld [vmem:[#allocation15 + $0x60] sm:$0xff]
    %v1371 = vld [vmem:[#allocation15 + $0x68] sm:$0xff]
    %v1372 = vld [vmem:[#allocation15 + $0x70] sm:$0xff]
    %v1373 = vld [vmem:[#allocation15 + $0x78] sm:$0xff]
    %v1374 = vld [vmem:[%s7] sm:$0x1]
    %v1376 = vlaneseq
    %v1377 = vshrl.u32 %v1376, 7
    %v1378 = vsub.s32 0, %v1377
    %v1379 = vrot.slane %v1374, %v1378
    %1381 = vmatprep.subr.mxu0 0.0
    %1382 = vmatpush1.msra.mxu0 %v1358
    %1383 = vmatprep.subr.mxu0 0.0
    %1384 = vmatpush1.msra.mxu0 %v1359
    %1385 = vmatprep.subr.mxu0 0.0
    %1386 = vmatpush1.msra.mxu0 %v1360
    %1387 = vmatprep.subr.mxu0 0.0
    %1388 = vmatpush1.msra.mxu0 %v1361
    %1389 = vmatprep.subr.mxu0 0.0
    %1390 = vmatpush1.msra.mxu0 %v1362
    %1391 = vmatprep.subr.mxu0 0.0
    %1392 = vmatpush1.msra.mxu0 %v1363
    %1393 = vmatprep.subr.mxu0 0.0
    %1394 = vmatpush1.msra.mxu0 %v1364
    %1395 = vmatprep.subr.mxu0 0.0
    %1396 = vmatpush1.msra.mxu0 %v1365
    %1397 = vmatprep.subr.mxu0 0.0
    %1398 = vmatpush1.msra.mxu0 %v1366
    %1399 = vmatprep.subr.mxu0 0.0
    %1400 = vmatpush1.msra.mxu0 %v1367
    %1401 = vmatprep.subr.mxu0 0.0
    %1402 = vmatpush1.msra.mxu0 %v1368
    %1403 = vmatprep.subr.mxu0 0.0
    %1404 = vmatpush1.msra.mxu0 %v1369
    %1405 = vmatprep.subr.mxu0 0.0
    %1406 = vmatpush1.msra.mxu0 %v1370
    %1407 = vmatprep.subr.mxu0 0.0
    %1408 = vmatpush1.msra.mxu0 %v1371
    %1409 = vmatprep.subr.mxu0 0.0
    %1410 = vmatpush1.msra.mxu0 %v1372
    %1411 = vmatprep.subr.mxu0 0.0
    %1412 = vmatpush1.msra.mxu0 %v1373
    %1413 = vmatprep.subr.mxu0 0.0
    %1414 = vmatpush1.msra.mxu0 0.0
    %1415 = vmatprep.subr.mxu0 0.0
    %1416 = vmatpush1.msra.mxu0 0.0
    %1417 = vmatprep.subr.mxu0 0.0
    %1418 = vmatpush1.msra.mxu0 0.0
    %1419 = vmatprep.subr.mxu0 0.0
    %1420 = vmatpush1.msra.mxu0 0.0
    %1421 = vmatprep.subr.mxu0 0.0
    %1422 = vmatpush1.msra.mxu0 0.0
    %1423 = vmatprep.subr.mxu0 0.0
    %1424 = vmatpush1.msra.mxu0 0.0
    %1425 = vmatprep.subr.mxu0 0.0
    %1426 = vmatpush1.msra.mxu0 0.0
    %1427 = vmatprep.subr.mxu0 0.0
    %1428 = vmatpush1.msra.mxu0 0.0
    %1429 = vmatprep.subr.mxu0 0.0
    %1430 = vmatpush1.msra.mxu0 0.0
    %1431 = vmatprep.subr.mxu0 0.0
    %1432 = vmatpush1.msra.mxu0 0.0
    %1433 = vmatprep.subr.mxu0 0.0
    %1434 = vmatpush1.msra.mxu0 0.0
    %1435 = vmatprep.subr.mxu0 0.0
    %1436 = vmatpush1.msra.mxu0 0.0
    %1437 = vmatprep.subr.mxu0 0.0
    %1438 = vmatpush1.msra.mxu0 0.0
    %1439 = vmatprep.subr.mxu0 0.0
    %1440 = vmatpush1.msra.mxu0 0.0
    %1441 = vmatprep.subr.mxu0 0.0
    %1442 = vmatpush1.msra.mxu0 0.0
    %1443 = vmatprep.subr.mxu0 0.0
    %1444 = vmatpush1.msra.mxu0 0.0
    %1445 = vmatprep.mubr.f32.mxu0 0.0
    %1446 = vmatmul.mubr.f32.gmra.mrb[0].mxu0 %v1107
    %v1447 = vpop.f32.mrb[0].mxu0
    %v1448 = vadd.f32 %v1379, %v1447
    %v1449 = vpop.f32.mrb[0].mxu0
    %1450 = vdwg.mxu0
    %v1451 = vxor.u32 %v1448, 2147483648
    %v1452 = vmul.f32 %v1451, 1.442695
    %v1453 = vpow.pop %v1452
    %v1454 = vadd.f32 %v1453, 1.0
    %v1455 = vrcp.pop %v1454
    %v1456 = vmul.f32 1.0, %v1455
    %1457 = vst [vmem:[#allocation19] sm:$0xff] %v1456
    // Predicated region
    $region84: #{tpu_custom_call.1} parent=1 // pred_check
      _
    $region85: #{tpu_custom_call.1} parent=1 // pred_check_branch
      %1459 = sbr.rel (0) target = $region87
    $region86: #{tpu_custom_call.1} parent=1 // pred_region
      %s1461 = ssub.s32 256, 256
      %1462 = vsyncadd [#allocation6], %s1461
      %s1463 = sshll.u32 [#allocation16], 4
      %s1464 = int_to_ptr.vmem [resolvable:$true] %s1463
      %1469 = dma.vmem_to_hbm [thread:$0]  %s1464, 256, %s10, [#allocation6], 128, 128, 8
    $region87: #{tpu_custom_call.1} parent=1 // pred_fallthru
      _
    // Predicated region
    $region88: #{tpu_custom_call.1} parent=1 // pred_check
      _
    $region89: #{tpu_custom_call.1} parent=1 // pred_check_branch
      %1471 = sbr.rel (0) target = $region91
    $region90: #{tpu_custom_call.1} parent=1 // pred_region
      %s1473 = ssub.s32 256, 256
      %1474 = vsyncadd [#allocation18], %s1473
      %s1475 = sshll.u32 [#allocation17], 4
      %s1476 = int_to_ptr.vmem [resolvable:$true] %s1475
      %1481 = dma.vmem_to_hbm [thread:$0]  %s1476, 256, %s11, [#allocation18], 128, 128, 8
    $region91: #{tpu_custom_call.1} parent=1 // pred_fallthru
      _
    // Predicated region
    $region92: #{tpu_custom_call.1} parent=1 // pred_check
      _
    $region93: #{tpu_custom_call.1} parent=1 // pred_check_branch
      %1483 = sbr.rel (0) target = $region95
    $region94: #{tpu_custom_call.1} parent=1 // pred_region
      %s1485 = ssub.s32 128, 128
      %1486 = vsyncadd [#allocation18], %s1485
      %s1488 = sshll.u32 [#allocation19], 4
      %s1489 = int_to_ptr.vmem [resolvable:$true] %s1488
      %1491 = dma.vmem_to_hbm [thread:$0]  %s1489, 128, %s12, [#allocation18]
    $region95: #{tpu_custom_call.1} parent=1 // pred_fallthru
      _
    // Predicated region
    $region96: #{tpu_custom_call.1} parent=1 // pred_check
      _
    $region97: #{tpu_custom_call.1} parent=1 // pred_check_branch
      %1493 = sbr.rel (0) target = $region99
    $region98: #{tpu_custom_call.1} parent=1 // pred_region
      %1494 = dma.done [#allocation6], 256
    $region99: #{tpu_custom_call.1} parent=1 // pred_fallthru
      _
    // Predicated region
    $region100: #{tpu_custom_call.1} parent=1 // pred_check
      _
    $region101: #{tpu_custom_call.1} parent=1 // pred_check_branch
      %1496 = sbr.rel (0) target = $region103
    $region102: #{tpu_custom_call.1} parent=1 // pred_region
      %1497 = dma.done [#allocation18], 256
    $region103: #{tpu_custom_call.1} parent=1 // pred_fallthru
      _
    // Predicated region
    $region104: #{tpu_custom_call.1} parent=1 // pred_check
      _
    $region105: #{tpu_custom_call.1} parent=1 // pred_check_branch
      %1499 = sbr.rel (0) target = $region107
    $region106: #{tpu_custom_call.1} parent=1 // pred_region
      %1500 = dma.done [#allocation18], 128
    $region107: #{tpu_custom_call.1} parent=1 // pred_fallthru
      _
    %1501 = vsyncpa [#allocation5], 1
    %1502 = vsyncpa [#allocation8], 1
    %1503 = vsyncpa [#allocation11], 1
    %1504 = vsyncpa [#allocation14], 1
    %1505 = vsyncpa [#allocation6], 1
    %1506 = vsyncpa [#allocation18], 1

</llo_original>
